<compile_context>
chip_gen: v7x
topology: tpu7x:2x2x1
jax: 0.10.0
libtpu: 0.0.40
codegen_flags: <defaults>
</compile_context>

<pallas_src>
import functools

import jax
import jax.numpy as jnp
from jax.experimental import pallas as pl
from jax.experimental.pallas import tpu as pltpu


_VMEM_LIMIT = 32 * 1024 * 1024   # safe on v5e/v6e/v7x; >= all default scoped limits


# ---------------------------------------------------------------------------
# Pallas kernels
# ---------------------------------------------------------------------------

def _mm_stats_kernel(w_ref, a_ref, o_ref, st_ref):
    """out(Co, tm) = W(Co,K) @ A(K,tm) (bf16 in, f32 acc);
    per-tile BN partials [sum, sumsq] written to st_ref (1, Co, 2)."""
    acc = jnp.dot(w_ref[...], a_ref[...], preferred_element_type=jnp.float32)
    o_ref[...] = acc.astype(o_ref.dtype)
    st_ref[0, :, 0:1] = jnp.sum(acc, axis=1, keepdims=True)
    st_ref[0, :, 1:2] = jnp.sum(acc * acc, axis=1, keepdims=True)


def _mm_bias_act_kernel(w_ref, a_ref, b_ref, o_ref, *, act):
    """out(Co, tm) = act(W(Co,K) @ A(K,tm) + bias(Co,1))."""
    acc = jnp.dot(w_ref[...], a_ref[...], preferred_element_type=jnp.float32)
    acc = acc + b_ref[...]
    if act == "tanh":
        acc = jnp.tanh(acc)
    elif act == "relu":
        acc = jnp.maximum(acc, 0.0)
    o_ref[...] = acc.astype(o_ref.dtype)


# ---------------------------------------------------------------------------
# pallas_call wrappers
# ---------------------------------------------------------------------------

def _round_up(x, m):
    return ((x + m - 1) // m) * m


def _tiling(M, max_tile_m):
    """Lane tile (multiple of 128, <= max_tile_m) and padded M."""
    tm = min(max_tile_m, _round_up(M, 128))
    Mp = _round_up(M, tm)
    return tm, Mp


def conv_mm_stats(wmat, amat, *, out_dtype=jnp.bfloat16, max_tile_m=2048):
    """(Co,K)@(K,M) -> out (Co,M) and per-channel sum / sumsq (Co,) each."""
    Co, K = wmat.shape
    _, M = amat.shape
    tm, Mp = _tiling(M, max_tile_m)
    if Mp != M:
        amat = jnp.pad(amat, ((0, 0), (0, Mp - M)))   # zero cols: exact no-op
    nt = Mp // tm
    wmat = wmat.astype(jnp.bfloat16)
    amat = amat.astype(jnp.bfloat16)
    cost = pl.CostEstimate(
        flops=2 * Co * K * Mp,
        transcendentals=0,
        bytes_accessed=2 * (Co * K + K * Mp)
        + Co * Mp * jnp.dtype(out_dtype).itemsize + nt * Co * 2 * 4)
    out, stats = pl.pallas_call(
        _mm_stats_kernel,
        out_shape=(jax.ShapeDtypeStruct((Co, Mp), out_dtype),
                   jax.ShapeDtypeStruct((nt, Co, 2), jnp.float32)),
        grid=(nt,),
        in_specs=[pl.BlockSpec((Co, K), lambda i: (0, 0)),
                  pl.BlockSpec((K, tm), lambda i: (0, i))],
        out_specs=(pl.BlockSpec((Co, tm), lambda i: (0, i)),
                   pl.BlockSpec((1, Co, 2), lambda i: (i, 0, 0))),
        compiler_params=pltpu.CompilerParams(
            dimension_semantics=("parallel",),   # disjoint output blocks per tile
            vmem_limit_bytes=_VMEM_LIMIT),
        cost_estimate=cost,
    )(wmat, amat)
    s = jnp.sum(stats[..., 0], axis=0)   # (Co,)
    q = jnp.sum(stats[..., 1], axis=0)   # (Co,)
    return out[:, :M], s, q


def conv_mm_bias_act(wmat, amat, bias, act, *, out_dtype=jnp.float32,
                     max_tile_m=2048):
    """(Co,K)@(K,M) + bias, with activation epilogue. No BN stats."""
    Co, K = wmat.shape
    _, M = amat.shape
    tm, Mp = _tiling(M, max_tile_m)
    if Mp != M:
        amat = jnp.pad(amat, ((0, 0), (0, Mp - M)))
    nt = Mp // tm
    wmat = wmat.astype(jnp.bfloat16)
    amat = amat.astype(jnp.bfloat16)
    bias = bias.astype(jnp.float32)
    cost = pl.CostEstimate(
        flops=2 * Co * K * Mp,
        transcendentals=Co * Mp if act == "tanh" else 0,
        bytes_accessed=2 * (Co * K + K * Mp)
        + Co * Mp * jnp.dtype(out_dtype).itemsize + Co * 4)
    out = pl.pallas_call(
        functools.partial(_mm_bias_act_kernel, act=act),
        out_shape=jax.ShapeDtypeStruct((Co, Mp), out_dtype),
        grid=(nt,),
        in_specs=[pl.BlockSpec((Co, K), lambda i: (0, 0)),
                  pl.BlockSpec((K, tm), lambda i: (0, i)),
                  pl.BlockSpec((Co, 1), lambda i: (0, 0))],
        out_specs=pl.BlockSpec((Co, tm), lambda i: (0, i)),
        compiler_params=pltpu.CompilerParams(
            dimension_semantics=("parallel",),
            vmem_limit_bytes=_VMEM_LIMIT),
        cost_estimate=cost,
    )(wmat, amat, bias)
    return out[:, :M]


# ---------------------------------------------------------------------------
# Plain-JAX glue: patch extraction (fused by XLA with the BN affine + ReLU),
# weight-layout helpers, BN scale/bias folding.
# Internal activation layout is CNHW: (C, N, H, W), bf16 between layers.
# ---------------------------------------------------------------------------

def im2col_T(x_cnhw, k, stride, pad):
    """A operand (k*k*C, N*Ho*Wo) for a stride-`stride` conv, CNHW input."""
    C, N, H, W = x_cnhw.shape
    xp = jnp.pad(x_cnhw, ((0, 0), (0, 0), (pad, pad), (pad, pad)))
    Ho = (H + 2 * pad - k) // stride + 1
    Wo = (W + 2 * pad - k) // stride + 1
    taps = [xp[:, :, di:di + stride * Ho:stride, dj:dj + stride * Wo:stride]
            for di in range(k) for dj in range(k)]
    A = jnp.stack(taps, axis=0)                      # (k*k, C, N, Ho, Wo)
    return A.reshape(k * k * C, N * Ho * Wo), (N, Ho, Wo)


def _subpixel_patches(x_cnhw):
    """2x2 patch operand (4*C, N*H*W) for the stride-2 transposed conv."""
    C, N, H, W = x_cnhw.shape
    xp = jnp.pad(x_cnhw, ((0, 0), (0, 0), (0, 1), (0, 1)))
    taps = [xp[:, :, dy:dy + H, dx:dx + W] for dy in (0, 1) for dx in (0, 1)]
    A = jnp.stack(taps, axis=0)                      # (4, C, N, H, W)
    return A.reshape(4 * C, N * H * W), (N, H, W)


def _subpixel_weight(w):
    """PyTorch ConvTranspose2d weight (Cin,Cout,3,3) -> (4*Cout, 4*Cin).

    Row (py*2+px)*Cout+co, col (dy*2+dx)*Cin+ci holds w[ci,co,ky,kx] with
    ky = py-2*dy+1, kx = px-2*dx+1 (zero if out of range). Valid for
    stride=2, padding=1, output_padding=1, kernel 3x3.
    """
    Cin, Cout, k, _ = w.shape
    rows = []
    for py in range(2):
        for px in range(2):
            cols = []
            for dy in range(2):
                for dx in range(2):
                    ky, kx = py - 2 * dy + 1, px - 2 * dx + 1
                    if 0 <= ky < k and 0 <= kx < k:
                        cols.append(jnp.transpose(w[:, :, ky, kx]))  # (Cout,Cin)
                    else:
                        cols.append(jnp.zeros((Cout, Cin), w.dtype))
            rows.append(jnp.concatenate(cols, axis=1))               # (Cout,4Cin)
    return jnp.concatenate(rows, axis=0)                             # (4Cout,4Cin)


def _interleave_phases(o4, Cout, N, H, W):
    """(4*Cout, N*H*W) phase-major output -> (Cout, N, 2H, 2W)."""
    o = o4.reshape(2, 2, Cout, N, H, W)
    o = jnp.transpose(o, (2, 3, 4, 0, 5, 1))         # (Cout, N, H, py, W, px)
    return o.reshape(Cout, N, 2 * H, 2 * W)


def _bn_fold(s, q, count, gamma, beta, eps=1e-5):
    """Per-channel scale/bias from in-kernel sum / sumsq (training-mode BN)."""
    mean = s / count
    var = jnp.maximum(q / count - mean * mean, 0.0)  # biased var, clamped >= 0
    scale = gamma * jax.lax.rsqrt(var + eps)
    bias = beta - mean * scale
    return scale, bias


# ---------------------------------------------------------------------------
# Layer wrappers
# ---------------------------------------------------------------------------

def conv_bn_relu(x, w, gamma, beta, eps=1e-5):
    """Conv2d(k=3, s=2, p=1, bias skipped) + BatchNorm(batch stats) + ReLU."""
    Cout, Cin, k, _ = w.shape
    A, (N, Ho, Wo) = im2col_T(x, k=3, stride=2, pad=1)
    wmat = jnp.transpose(w, (0, 2, 3, 1)).reshape(Cout, k * k * Cin)
    out, s, q = conv_mm_stats(wmat, A)
    scale, bias = _bn_fold(s, q, N * Ho * Wo, gamma, beta, eps)
    y = jnp.maximum(out.astype(jnp.float32) * scale[:, None] + bias[:, None], 0.0)
    return y.astype(jnp.bfloat16).reshape(Cout, N, Ho, Wo)


def deconv_bn_relu(x, w, gamma, beta, eps=1e-5):
    """ConvTranspose2d(k=3,s=2,p=1,op=1, bias skipped) + BatchNorm + ReLU."""
    Cin, Cout, k, _ = w.shape
    A, (N, H, W) = _subpixel_patches(x)
    w4 = _subpixel_weight(w)
    out, s, q = conv_mm_stats(w4, A)
    s = jnp.sum(s.reshape(4, Cout), axis=0)
    q = jnp.sum(q.reshape(4, Cout), axis=0)
    scale, bias = _bn_fold(s, q, 4 * N * H * W, gamma, beta, eps)
    y = _interleave_phases(out.astype(jnp.float32), Cout, N, H, W)
    y = jnp.maximum(y * scale[:, None, None, None]
                    + bias[:, None, None, None], 0.0)
    return y.astype(jnp.bfloat16)


def deconv_bias_tanh(x, w, b):
    """Final ConvTranspose2d with bias, Tanh fused as the matmul epilogue."""
    Cin, Cout, k, _ = w.shape
    A, (N, H, W) = _subpixel_patches(x)
    w4 = _subpixel_weight(w)
    b4 = jnp.tile(b, 4).reshape(4 * Cout, 1)
    out = conv_mm_bias_act(w4, A, b4, act="tanh", out_dtype=jnp.float32)
    return _interleave_phases(out, Cout, N, H, W)


# ---------------------------------------------------------------------------
# Full forward pass
# ---------------------------------------------------------------------------

def conv_autoencoder_forward(x_nchw, p):
    x = jnp.transpose(x_nchw, (1, 0, 2, 3)).astype(jnp.bfloat16)  # NCHW -> CNHW

    # encoder
    x = conv_bn_relu(x, p["e1_w"], p["bn1_g"], p["bn1_b"])
    x = conv_bn_relu(x, p["e2_w"], p["bn2_g"], p["bn2_b"])
    x = conv_bn_relu(x, p["e3_w"], p["bn3_g"], p["bn3_b"])

    # decoder
    x = deconv_bn_relu(x, p["d1_w"], p["bn4_g"], p["bn4_b"])
    x = deconv_bn_relu(x, p["d2_w"], p["bn5_g"], p["bn5_b"])
    x = deconv_bias_tanh(x, p["d3_w"], p["d3_b"])

    return jnp.transpose(x, (1, 0, 2, 3)).astype(jnp.float32)     # CNHW -> NCHW


# ---------------------------------------------------------------------------
# Deterministic parameter init (shapes from ConvAutoencoder.__init__)
# ---------------------------------------------------------------------------

def init_params(key):
    ks = jax.random.split(key, 12)

    def nrm(k, shape, s=0.1):
        return (s * jax.random.normal(k, shape)).astype(jnp.float32)

    params = {
        # encoder convs: (Cout, Cin, 3, 3)
        "e1_w": nrm(ks[0], (32, 1, 3, 3)),  "e1_b": nrm(ks[1], (32,)),
        "e2_w": nrm(ks[2], (16, 32, 3, 3)), "e2_b": nrm(ks[3], (16,)),
        "e3_w": nrm(ks[4], (8, 16, 3, 3)),  "e3_b": nrm(ks[5], (8,)),
        # decoder conv-transposes: (Cin, Cout, 3, 3)
        "d1_w": nrm(ks[6], (8, 16, 3, 3)),  "d1_b": nrm(ks[7], (16,)),
        "d2_w": nrm(ks[8], (16, 32, 3, 3)), "d2_b": nrm(ks[9], (32,)),
        "d3_w": nrm(ks[10], (32, 1, 3, 3)), "d3_b": nrm(ks[11], (1,)),
        # batchnorm affine params (PyTorch default init: gamma=1, beta=0)
        # NOTE: e*_b / d1_b / d2_b cancel exactly through training-mode BN and
        # are deliberately not applied in the fused kernels.
        "bn1_g": jnp.ones((32,), jnp.float32), "bn1_b": jnp.zeros((32,), jnp.float32),
        "bn2_g": jnp.ones((16,), jnp.float32), "bn2_b": jnp.zeros((16,), jnp.float32),
        "bn3_g": jnp.ones((8,),  jnp.float32), "bn3_b": jnp.zeros((8,),  jnp.float32),
        "bn4_g": jnp.ones((16,), jnp.float32), "bn4_b": jnp.zeros((16,), jnp.float32),
        "bn5_g": jnp.ones((32,), jnp.float32), "bn5_b": jnp.zeros((32,), jnp.float32),
    }
    return params


if __name__ == "__main__":
    key = jax.random.PRNGKey(0)
    k_param, k_x = jax.random.split(key)
    params = init_params(k_param)

    # (N=2, C=1, H=16, W=16): the 3x stride-2 encode / decode round-trips exactly.
    x = jax.random.normal(k_x, (2, 1, 16, 16), dtype=jnp.float32)

    fwd = jax.jit(conv_autoencoder_forward)
    y = fwd(x, params)
    jax.block_until_ready(y)

    assert y.shape == (2, 1, 16, 16), y.shape
    assert y.dtype == jnp.float32
    assert bool(jnp.all(jnp.isfinite(y)))
    assert bool(jnp.all(jnp.abs(y) <= 1.0))   # tanh output range

    print("KERNEL_OK")
</pallas_src>

<mosaic_0001>
module attributes {stable_mosaic.version = 11 : i64} {
  func.func @_mm_stats_kernel(%arg0: i32, %arg1: memref<32x9xbf16, #tpu.memory_space<vmem>>, %arg2: memref<9x128xbf16, #tpu.memory_space<vmem>>, %arg3: memref<32x128xbf16, #tpu.memory_space<vmem>>, %arg4: memref<1x32x2xf32, #tpu.memory_space<vmem>>) attributes {dimension_semantics = [#tpu.dimension_semantics<parallel>], iteration_bounds = array<i64: 1>, scalar_prefetch = 0 : i64, scratch_operands = 0 : i64, tpu.core_type = #tpu.core_type<tc>, window_params = [{pipeline_mode = #tpu.pipeline_mode<synchronous>, transform_indices = @transform_0, window_bounds = array<i64: 32, 9>}, {transform_indices = @transform_1, window_bounds = array<i64: 9, 128>}, {transform_indices = @transform_2, window_bounds = array<i64: 32, 128>}, {transform_indices = @transform_3, window_bounds = array<i64: 1, 32, 2>}]} {
    %c0 = arith.constant 0 : index
    %c0_0 = arith.constant 0 : index
    %0 = vector.load %arg1[%c0, %c0_0] : memref<32x9xbf16, #tpu.memory_space<vmem>>, vector<32x9xbf16>
    %c0_1 = arith.constant 0 : index
    %c0_2 = arith.constant 0 : index
    %1 = vector.load %arg2[%c0_1, %c0_2] : memref<9x128xbf16, #tpu.memory_space<vmem>>, vector<9x128xbf16>
    %cst = arith.constant dense<0.000000e+00> : vector<32x128xf32>
    %2 = tpu.matmul %0, %1, %cst {dimension_numbers = #tpu.dot_dimension_numbers<[1], [0], [0], [1], [0, 0, 1, 1], [], []>} : vector<32x9xbf16>, vector<9x128xbf16>, vector<32x128xf32> -> vector<32x128xf32>
    %3 = arith.truncf %2 : vector<32x128xf32> to vector<32x128xbf16>
    %c0_3 = arith.constant 0 : index
    %c0_4 = arith.constant 0 : index
    %4 = vector.load %arg3[%c0_3, %c0_4] : memref<32x128xbf16, #tpu.memory_space<vmem>>, vector<32x128xbf16>
    tpu.vector_store %arg3[%c0_3, %c0_4], %3 {strides = array<i32>} : memref<32x128xbf16, #tpu.memory_space<vmem>>, vector<32x128xbf16>,
    %cst_5 = arith.constant dense<0.000000e+00> : vector<32xf32>
    %5 = vector.multi_reduction <add>, %2, %cst_5 [1] : vector<32x128xf32> to vector<32xf32>
    %6 = vector.shape_cast %5 : vector<32xf32> to vector<32x1xf32>
    %c0_6 = arith.constant 0 : index
    %c0_7 = arith.constant 0 : index
    %c0_8 = arith.constant 0 : index
    %7 = vector.load %arg4[%c0_6, %c0_7, %c0_8] : memref<1x32x2xf32, #tpu.memory_space<vmem>>, vector<1x32x1xf32>
    %8 = vector.shape_cast %7 : vector<1x32x1xf32> to vector<32x1xf32>
    %9 = vector.shape_cast %6 : vector<32x1xf32> to vector<1x32x1xf32>
    tpu.vector_store %arg4[%c0_6, %c0_7, %c0_8], %9 {strides = array<i32>} : memref<1x32x2xf32, #tpu.memory_space<vmem>>, vector<1x32x1xf32>,
    %10 = arith.mulf %2, %2 : vector<32x128xf32>
    %cst_9 = arith.constant dense<0.000000e+00> : vector<32xf32>
    %11 = vector.multi_reduction <add>, %10, %cst_9 [1] : vector<32x128xf32> to vector<32xf32>
    %12 = vector.shape_cast %11 : vector<32xf32> to vector<32x1xf32>
    %c0_10 = arith.constant 0 : index
    %c0_11 = arith.constant 0 : index
    %c1 = arith.constant 1 : index
    %13 = vector.load %arg4[%c0_10, %c0_11, %c1] : memref<1x32x2xf32, #tpu.memory_space<vmem>>, vector<1x32x1xf32>
    %14 = vector.shape_cast %13 : vector<1x32x1xf32> to vector<32x1xf32>
    %15 = vector.shape_cast %12 : vector<32x1xf32> to vector<1x32x1xf32>
    tpu.vector_store %arg4[%c0_10, %c0_11, %c1], %15 {strides = array<i32>} : memref<1x32x2xf32, #tpu.memory_space<vmem>>, vector<1x32x1xf32>,
    return
  }
  func.func @transform_0(%arg0: i32) -> (i32, i32) {
    %c0_i32 = arith.constant 0 : i32
    %c0_i32_0 = arith.constant 0 : i32
    %c0_i32_1 = arith.constant 0 : i32
    return %c0_i32, %c0_i32_0 : i32, i32
  }
  func.func @transform_1(%arg0: i32) -> (i32, i32) {
    %c0_i32 = arith.constant 0 : i32
    %c0_i32_0 = arith.constant 0 : i32
    return %c0_i32, %arg0 : i32, i32
  }
  func.func @transform_2(%arg0: i32) -> (i32, i32) {
    %c0_i32 = arith.constant 0 : i32
    %c0_i32_0 = arith.constant 0 : i32
    return %c0_i32, %arg0 : i32, i32
  }
  func.func @transform_3(%arg0: i32) -> (i32, i32, i32) {
    %c0_i32 = arith.constant 0 : i32
    %c0_i32_0 = arith.constant 0 : i32
    %c0_i32_1 = arith.constant 0 : i32
    return %arg0, %c0_i32, %c0_i32_0 : i32, i32, i32
  }
}

module attributes {stable_mosaic.version = 11 : i64} {
  func.func @_mm_stats_kernel(%arg0: i32, %arg1: memref<16x288xbf16, #tpu.memory_space<vmem>>, %arg2: memref<288x128xbf16, #tpu.memory_space<vmem>>, %arg3: memref<16x128xbf16, #tpu.memory_space<vmem>>, %arg4: memref<1x16x2xf32, #tpu.memory_space<vmem>>) attributes {dimension_semantics = [#tpu.dimension_semantics<parallel>], iteration_bounds = array<i64: 1>, scalar_prefetch = 0 : i64, scratch_operands = 0 : i64, tpu.core_type = #tpu.core_type<tc>, window_params = [{pipeline_mode = #tpu.pipeline_mode<synchronous>, transform_indices = @transform_0, window_bounds = array<i64: 16, 288>}, {transform_indices = @transform_1, window_bounds = array<i64: 288, 128>}, {transform_indices = @transform_2, window_bounds = array<i64: 16, 128>}, {transform_indices = @transform_3, window_bounds = array<i64: 1, 16, 2>}]} {
    %c0 = arith.constant 0 : index
    %c0_0 = arith.constant 0 : index
    %0 = vector.load %arg1[%c0, %c0_0] : memref<16x288xbf16, #tpu.memory_space<vmem>>, vector<16x288xbf16>
    %c0_1 = arith.constant 0 : index
    %c0_2 = arith.constant 0 : index
    %1 = vector.load %arg2[%c0_1, %c0_2] : memref<288x128xbf16, #tpu.memory_space<vmem>>, vector<288x128xbf16>
    %cst = arith.constant dense<0.000000e+00> : vector<16x128xf32>
    %2 = tpu.matmul %0, %1, %cst {dimension_numbers = #tpu.dot_dimension_numbers<[1], [0], [0], [1], [0, 0, 1, 1], [], []>} : vector<16x288xbf16>, vector<288x128xbf16>, vector<16x128xf32> -> vector<16x128xf32>
    %3 = arith.truncf %2 : vector<16x128xf32> to vector<16x128xbf16>
    %c0_3 = arith.constant 0 : index
    %c0_4 = arith.constant 0 : index
    %4 = vector.load %arg3[%c0_3, %c0_4] : memref<16x128xbf16, #tpu.memory_space<vmem>>, vector<16x128xbf16>
    tpu.vector_store %arg3[%c0_3, %c0_4], %3 {strides = array<i32>} : memref<16x128xbf16, #tpu.memory_space<vmem>>, vector<16x128xbf16>,
    %cst_5 = arith.constant dense<0.000000e+00> : vector<16xf32>
    %5 = vector.multi_reduction <add>, %2, %cst_5 [1] : vector<16x128xf32> to vector<16xf32>
    %6 = vector.shape_cast %5 : vector<16xf32> to vector<16x1xf32>
    %c0_6 = arith.constant 0 : index
    %c0_7 = arith.constant 0 : index
    %c0_8 = arith.constant 0 : index
    %7 = vector.load %arg4[%c0_6, %c0_7, %c0_8] : memref<1x16x2xf32, #tpu.memory_space<vmem>>, vector<1x16x1xf32>
    %8 = vector.shape_cast %7 : vector<1x16x1xf32> to vector<16x1xf32>
    %9 = vector.shape_cast %6 : vector<16x1xf32> to vector<1x16x1xf32>
    tpu.vector_store %arg4[%c0_6, %c0_7, %c0_8], %9 {strides = array<i32>} : memref<1x16x2xf32, #tpu.memory_space<vmem>>, vector<1x16x1xf32>,
    %10 = arith.mulf %2, %2 : vector<16x128xf32>
    %cst_9 = arith.constant dense<0.000000e+00> : vector<16xf32>
    %11 = vector.multi_reduction <add>, %10, %cst_9 [1] : vector<16x128xf32> to vector<16xf32>
    %12 = vector.shape_cast %11 : vector<16xf32> to vector<16x1xf32>
    %c0_10 = arith.constant 0 : index
    %c0_11 = arith.constant 0 : index
    %c1 = arith.constant 1 : index
    %13 = vector.load %arg4[%c0_10, %c0_11, %c1] : memref<1x16x2xf32, #tpu.memory_space<vmem>>, vector<1x16x1xf32>
    %14 = vector.shape_cast %13 : vector<1x16x1xf32> to vector<16x1xf32>
    %15 = vector.shape_cast %12 : vector<16x1xf32> to vector<1x16x1xf32>
    tpu.vector_store %arg4[%c0_10, %c0_11, %c1], %15 {strides = array<i32>} : memref<1x16x2xf32, #tpu.memory_space<vmem>>, vector<1x16x1xf32>,
    return
  }
  func.func @transform_0(%arg0: i32) -> (i32, i32) {
    %c0_i32 = arith.constant 0 : i32
    %c0_i32_0 = arith.constant 0 : i32
    %c0_i32_1 = arith.constant 0 : i32
    return %c0_i32, %c0_i32_0 : i32, i32
  }
  func.func @transform_1(%arg0: i32) -> (i32, i32) {
    %c0_i32 = arith.constant 0 : i32
    %c0_i32_0 = arith.constant 0 : i32
    return %c0_i32, %arg0 : i32, i32
  }
  func.func @transform_2(%arg0: i32) -> (i32, i32) {
    %c0_i32 = arith.constant 0 : i32
    %c0_i32_0 = arith.constant 0 : i32
    return %c0_i32, %arg0 : i32, i32
  }
  func.func @transform_3(%arg0: i32) -> (i32, i32, i32) {
    %c0_i32 = arith.constant 0 : i32
    %c0_i32_0 = arith.constant 0 : i32
    %c0_i32_1 = arith.constant 0 : i32
    return %arg0, %c0_i32, %c0_i32_0 : i32, i32, i32
  }
}

module attributes {stable_mosaic.version = 11 : i64} {
  func.func @_mm_stats_kernel(%arg0: i32, %arg1: memref<8x144xbf16, #tpu.memory_space<vmem>>, %arg2: memref<144x128xbf16, #tpu.memory_space<vmem>>, %arg3: memref<8x128xbf16, #tpu.memory_space<vmem>>, %arg4: memref<1x8x2xf32, #tpu.memory_space<vmem>>) attributes {dimension_semantics = [#tpu.dimension_semantics<parallel>], iteration_bounds = array<i64: 1>, scalar_prefetch = 0 : i64, scratch_operands = 0 : i64, tpu.core_type = #tpu.core_type<tc>, window_params = [{pipeline_mode = #tpu.pipeline_mode<synchronous>, transform_indices = @transform_0, window_bounds = array<i64: 8, 144>}, {transform_indices = @transform_1, window_bounds = array<i64: 144, 128>}, {transform_indices = @transform_2, window_bounds = array<i64: 8, 128>}, {transform_indices = @transform_3, window_bounds = array<i64: 1, 8, 2>}]} {
    %c0 = arith.constant 0 : index
    %c0_0 = arith.constant 0 : index
    %0 = vector.load %arg1[%c0, %c0_0] : memref<8x144xbf16, #tpu.memory_space<vmem>>, vector<8x144xbf16>
    %c0_1 = arith.constant 0 : index
    %c0_2 = arith.constant 0 : index
    %1 = vector.load %arg2[%c0_1, %c0_2] : memref<144x128xbf16, #tpu.memory_space<vmem>>, vector<144x128xbf16>
    %cst = arith.constant dense<0.000000e+00> : vector<8x128xf32>
    %2 = tpu.matmul %0, %1, %cst {dimension_numbers = #tpu.dot_dimension_numbers<[1], [0], [0], [1], [0, 0, 1, 1], [], []>} : vector<8x144xbf16>, vector<144x128xbf16>, vector<8x128xf32> -> vector<8x128xf32>
    %3 = arith.truncf %2 : vector<8x128xf32> to vector<8x128xbf16>
    %c0_3 = arith.constant 0 : index
    %c0_4 = arith.constant 0 : index
    %4 = vector.load %arg3[%c0_3, %c0_4] : memref<8x128xbf16, #tpu.memory_space<vmem>>, vector<8x128xbf16>
    tpu.vector_store %arg3[%c0_3, %c0_4], %3 {strides = array<i32>} : memref<8x128xbf16, #tpu.memory_space<vmem>>, vector<8x128xbf16>,
    %cst_5 = arith.constant dense<0.000000e+00> : vector<8xf32>
    %5 = vector.multi_reduction <add>, %2, %cst_5 [1] : vector<8x128xf32> to vector<8xf32>
    %6 = vector.shape_cast %5 : vector<8xf32> to vector<8x1xf32>
    %c0_6 = arith.constant 0 : index
    %c0_7 = arith.constant 0 : index
    %c0_8 = arith.constant 0 : index
    %7 = vector.load %arg4[%c0_6, %c0_7, %c0_8] : memref<1x8x2xf32, #tpu.memory_space<vmem>>, vector<1x8x1xf32>
    %8 = vector.shape_cast %7 : vector<1x8x1xf32> to vector<8x1xf32>
    %9 = vector.shape_cast %6 : vector<8x1xf32> to vector<1x8x1xf32>
    tpu.vector_store %arg4[%c0_6, %c0_7, %c0_8], %9 {strides = array<i32>} : memref<1x8x2xf32, #tpu.memory_space<vmem>>, vector<1x8x1xf32>,
    %10 = arith.mulf %2, %2 : vector<8x128xf32>
    %cst_9 = arith.constant dense<0.000000e+00> : vector<8xf32>
    %11 = vector.multi_reduction <add>, %10, %cst_9 [1] : vector<8x128xf32> to vector<8xf32>
    %12 = vector.shape_cast %11 : vector<8xf32> to vector<8x1xf32>
    %c0_10 = arith.constant 0 : index
    %c0_11 = arith.constant 0 : index
    %c1 = arith.constant 1 : index
    %13 = vector.load %arg4[%c0_10, %c0_11, %c1] : memref<1x8x2xf32, #tpu.memory_space<vmem>>, vector<1x8x1xf32>
    %14 = vector.shape_cast %13 : vector<1x8x1xf32> to vector<8x1xf32>
    %15 = vector.shape_cast %12 : vector<8x1xf32> to vector<1x8x1xf32>
    tpu.vector_store %arg4[%c0_10, %c0_11, %c1], %15 {strides = array<i32>} : memref<1x8x2xf32, #tpu.memory_space<vmem>>, vector<1x8x1xf32>,
    return
  }
  func.func @transform_0(%arg0: i32) -> (i32, i32) {
    %c0_i32 = arith.constant 0 : i32
    %c0_i32_0 = arith.constant 0 : i32
    %c0_i32_1 = arith.constant 0 : i32
    return %c0_i32, %c0_i32_0 : i32, i32
  }
  func.func @transform_1(%arg0: i32) -> (i32, i32) {
    %c0_i32 = arith.constant 0 : i32
    %c0_i32_0 = arith.constant 0 : i32
    return %c0_i32, %arg0 : i32, i32
  }
  func.func @transform_2(%arg0: i32) -> (i32, i32) {
    %c0_i32 = arith.constant 0 : i32
    %c0_i32_0 = arith.constant 0 : i32
    return %c0_i32, %arg0 : i32, i32
  }
  func.func @transform_3(%arg0: i32) -> (i32, i32, i32) {
    %c0_i32 = arith.constant 0 : i32
    %c0_i32_0 = arith.constant 0 : i32
    %c0_i32_1 = arith.constant 0 : i32
    return %arg0, %c0_i32, %c0_i32_0 : i32, i32, i32
  }
}

module attributes {stable_mosaic.version = 11 : i64} {
  func.func @_mm_stats_kernel(%arg0: i32, %arg1: memref<64x32xbf16, #tpu.memory_space<vmem>>, %arg2: memref<32x128xbf16, #tpu.memory_space<vmem>>, %arg3: memref<64x128xbf16, #tpu.memory_space<vmem>>, %arg4: memref<1x64x2xf32, #tpu.memory_space<vmem>>) attributes {dimension_semantics = [#tpu.dimension_semantics<parallel>], iteration_bounds = array<i64: 1>, scalar_prefetch = 0 : i64, scratch_operands = 0 : i64, tpu.core_type = #tpu.core_type<tc>, window_params = [{pipeline_mode = #tpu.pipeline_mode<synchronous>, transform_indices = @transform_0, window_bounds = array<i64: 64, 32>}, {transform_indices = @transform_1, window_bounds = array<i64: 32, 128>}, {transform_indices = @transform_2, window_bounds = array<i64: 64, 128>}, {transform_indices = @transform_3, window_bounds = array<i64: 1, 64, 2>}]} {
    %c0 = arith.constant 0 : index
    %c0_0 = arith.constant 0 : index
    %0 = vector.load %arg1[%c0, %c0_0] : memref<64x32xbf16, #tpu.memory_space<vmem>>, vector<64x32xbf16>
    %c0_1 = arith.constant 0 : index
    %c0_2 = arith.constant 0 : index
    %1 = vector.load %arg2[%c0_1, %c0_2] : memref<32x128xbf16, #tpu.memory_space<vmem>>, vector<32x128xbf16>
    %cst = arith.constant dense<0.000000e+00> : vector<64x128xf32>
    %2 = tpu.matmul %0, %1, %cst {dimension_numbers = #tpu.dot_dimension_numbers<[1], [0], [0], [1], [0, 0, 1, 1], [], []>} : vector<64x32xbf16>, vector<32x128xbf16>, vector<64x128xf32> -> vector<64x128xf32>
    %3 = arith.truncf %2 : vector<64x128xf32> to vector<64x128xbf16>
    %c0_3 = arith.constant 0 : index
    %c0_4 = arith.constant 0 : index
    %4 = vector.load %arg3[%c0_3, %c0_4] : memref<64x128xbf16, #tpu.memory_space<vmem>>, vector<64x128xbf16>
    tpu.vector_store %arg3[%c0_3, %c0_4], %3 {strides = array<i32>} : memref<64x128xbf16, #tpu.memory_space<vmem>>, vector<64x128xbf16>,
    %cst_5 = arith.constant dense<0.000000e+00> : vector<64xf32>
    %5 = vector.multi_reduction <add>, %2, %cst_5 [1] : vector<64x128xf32> to vector<64xf32>
    %6 = vector.shape_cast %5 : vector<64xf32> to vector<64x1xf32>
    %c0_6 = arith.constant 0 : index
    %c0_7 = arith.constant 0 : index
    %c0_8 = arith.constant 0 : index
    %7 = vector.load %arg4[%c0_6, %c0_7, %c0_8] : memref<1x64x2xf32, #tpu.memory_space<vmem>>, vector<1x64x1xf32>
    %8 = vector.shape_cast %7 : vector<1x64x1xf32> to vector<64x1xf32>
    %9 = vector.shape_cast %6 : vector<64x1xf32> to vector<1x64x1xf32>
    tpu.vector_store %arg4[%c0_6, %c0_7, %c0_8], %9 {strides = array<i32>} : memref<1x64x2xf32, #tpu.memory_space<vmem>>, vector<1x64x1xf32>,
    %10 = arith.mulf %2, %2 : vector<64x128xf32>
    %cst_9 = arith.constant dense<0.000000e+00> : vector<64xf32>
    %11 = vector.multi_reduction <add>, %10, %cst_9 [1] : vector<64x128xf32> to vector<64xf32>
    %12 = vector.shape_cast %11 : vector<64xf32> to vector<64x1xf32>
    %c0_10 = arith.constant 0 : index
    %c0_11 = arith.constant 0 : index
    %c1 = arith.constant 1 : index
    %13 = vector.load %arg4[%c0_10, %c0_11, %c1] : memref<1x64x2xf32, #tpu.memory_space<vmem>>, vector<1x64x1xf32>
    %14 = vector.shape_cast %13 : vector<1x64x1xf32> to vector<64x1xf32>
    %15 = vector.shape_cast %12 : vector<64x1xf32> to vector<1x64x1xf32>
    tpu.vector_store %arg4[%c0_10, %c0_11, %c1], %15 {strides = array<i32>} : memref<1x64x2xf32, #tpu.memory_space<vmem>>, vector<1x64x1xf32>,
    return
  }
  func.func @transform_0(%arg0: i32) -> (i32, i32) {
    %c0_i32 = arith.constant 0 : i32
    %c0_i32_0 = arith.constant 0 : i32
    %c0_i32_1 = arith.constant 0 : i32
    return %c0_i32, %c0_i32_0 : i32, i32
  }
  func.func @transform_1(%arg0: i32) -> (i32, i32) {
    %c0_i32 = arith.constant 0 : i32
    %c0_i32_0 = arith.constant 0 : i32
    return %c0_i32, %arg0 : i32, i32
  }
  func.func @transform_2(%arg0: i32) -> (i32, i32) {
    %c0_i32 = arith.constant 0 : i32
    %c0_i32_0 = arith.constant 0 : i32
    return %c0_i32, %arg0 : i32, i32
  }
  func.func @transform_3(%arg0: i32) -> (i32, i32, i32) {
    %c0_i32 = arith.constant 0 : i32
    %c0_i32_0 = arith.constant 0 : i32
    %c0_i32_1 = arith.constant 0 : i32
    return %arg0, %c0_i32, %c0_i32_0 : i32, i32, i32
  }
}

module attributes {stable_mosaic.version = 11 : i64} {
  func.func @_mm_stats_kernel(%arg0: i32, %arg1: memref<128x64xbf16, #tpu.memory_space<vmem>>, %arg2: memref<64x128xbf16, #tpu.memory_space<vmem>>, %arg3: memref<128x128xbf16, #tpu.memory_space<vmem>>, %arg4: memref<1x128x2xf32, #tpu.memory_space<vmem>>) attributes {dimension_semantics = [#tpu.dimension_semantics<parallel>], iteration_bounds = array<i64: 1>, scalar_prefetch = 0 : i64, scratch_operands = 0 : i64, tpu.core_type = #tpu.core_type<tc>, window_params = [{pipeline_mode = #tpu.pipeline_mode<synchronous>, transform_indices = @transform_0, window_bounds = array<i64: 128, 64>}, {transform_indices = @transform_1, window_bounds = array<i64: 64, 128>}, {transform_indices = @transform_2, window_bounds = array<i64: 128, 128>}, {transform_indices = @transform_3, window_bounds = array<i64: 1, 128, 2>}]} {
    %c0 = arith.constant 0 : index
    %c0_0 = arith.constant 0 : index
    %0 = vector.load %arg1[%c0, %c0_0] : memref<128x64xbf16, #tpu.memory_space<vmem>>, vector<128x64xbf16>
    %c0_1 = arith.constant 0 : index
    %c0_2 = arith.constant 0 : index
    %1 = vector.load %arg2[%c0_1, %c0_2] : memref<64x128xbf16, #tpu.memory_space<vmem>>, vector<64x128xbf16>
    %cst = arith.constant dense<0.000000e+00> : vector<128x128xf32>
    %2 = tpu.matmul %0, %1, %cst {dimension_numbers = #tpu.dot_dimension_numbers<[1], [0], [0], [1], [0, 0, 1, 1], [], []>} : vector<128x64xbf16>, vector<64x128xbf16>, vector<128x128xf32> -> vector<128x128xf32>
    %3 = arith.truncf %2 : vector<128x128xf32> to vector<128x128xbf16>
    %c0_3 = arith.constant 0 : index
    %c0_4 = arith.constant 0 : index
    %4 = vector.load %arg3[%c0_3, %c0_4] : memref<128x128xbf16, #tpu.memory_space<vmem>>, vector<128x128xbf16>
    tpu.vector_store %arg3[%c0_3, %c0_4], %3 {strides = array<i32>} : memref<128x128xbf16, #tpu.memory_space<vmem>>, vector<128x128xbf16>,
    %cst_5 = arith.constant dense<0.000000e+00> : vector<128xf32>
    %5 = vector.multi_reduction <add>, %2, %cst_5 [1] : vector<128x128xf32> to vector<128xf32>
    %6 = vector.shape_cast %5 : vector<128xf32> to vector<128x1xf32>
    %c0_6 = arith.constant 0 : index
    %c0_7 = arith.constant 0 : index
    %c0_8 = arith.constant 0 : index
    %7 = vector.load %arg4[%c0_6, %c0_7, %c0_8] : memref<1x128x2xf32, #tpu.memory_space<vmem>>, vector<1x128x1xf32>
    %8 = vector.shape_cast %7 : vector<1x128x1xf32> to vector<128x1xf32>
    %9 = vector.shape_cast %6 : vector<128x1xf32> to vector<1x128x1xf32>
    tpu.vector_store %arg4[%c0_6, %c0_7, %c0_8], %9 {strides = array<i32>} : memref<1x128x2xf32, #tpu.memory_space<vmem>>, vector<1x128x1xf32>,
    %10 = arith.mulf %2, %2 : vector<128x128xf32>
    %cst_9 = arith.constant dense<0.000000e+00> : vector<128xf32>
    %11 = vector.multi_reduction <add>, %10, %cst_9 [1] : vector<128x128xf32> to vector<128xf32>
    %12 = vector.shape_cast %11 : vector<128xf32> to vector<128x1xf32>
    %c0_10 = arith.constant 0 : index
    %c0_11 = arith.constant 0 : index
    %c1 = arith.constant 1 : index
    %13 = vector.load %arg4[%c0_10, %c0_11, %c1] : memref<1x128x2xf32, #tpu.memory_space<vmem>>, vector<1x128x1xf32>
    %14 = vector.shape_cast %13 : vector<1x128x1xf32> to vector<128x1xf32>
    %15 = vector.shape_cast %12 : vector<128x1xf32> to vector<1x128x1xf32>
    tpu.vector_store %arg4[%c0_10, %c0_11, %c1], %15 {strides = array<i32>} : memref<1x128x2xf32, #tpu.memory_space<vmem>>, vector<1x128x1xf32>,
    return
  }
  func.func @transform_0(%arg0: i32) -> (i32, i32) {
    %c0_i32 = arith.constant 0 : i32
    %c0_i32_0 = arith.constant 0 : i32
    %c0_i32_1 = arith.constant 0 : i32
    return %c0_i32, %c0_i32_0 : i32, i32
  }
  func.func @transform_1(%arg0: i32) -> (i32, i32) {
    %c0_i32 = arith.constant 0 : i32
    %c0_i32_0 = arith.constant 0 : i32
    return %c0_i32, %arg0 : i32, i32
  }
  func.func @transform_2(%arg0: i32) -> (i32, i32) {
    %c0_i32 = arith.constant 0 : i32
    %c0_i32_0 = arith.constant 0 : i32
    return %c0_i32, %arg0 : i32, i32
  }
  func.func @transform_3(%arg0: i32) -> (i32, i32, i32) {
    %c0_i32 = arith.constant 0 : i32
    %c0_i32_0 = arith.constant 0 : i32
    %c0_i32_1 = arith.constant 0 : i32
    return %arg0, %c0_i32, %c0_i32_0 : i32, i32, i32
  }
}

module attributes {stable_mosaic.version = 11 : i64} {
  func.func @_mm_bias_act_kernel(%arg0: i32, %arg1: memref<4x128xbf16, #tpu.memory_space<vmem>>, %arg2: memref<128x128xbf16, #tpu.memory_space<vmem>>, %arg3: memref<4x1xf32, #tpu.memory_space<vmem>>, %arg4: memref<4x128xf32, #tpu.memory_space<vmem>>) attributes {dimension_semantics = [#tpu.dimension_semantics<parallel>], iteration_bounds = array<i64: 1>, scalar_prefetch = 0 : i64, scratch_operands = 0 : i64, tpu.core_type = #tpu.core_type<tc>, window_params = [{pipeline_mode = #tpu.pipeline_mode<synchronous>, transform_indices = @transform_0, window_bounds = array<i64: 4, 128>}, {transform_indices = @transform_1, window_bounds = array<i64: 128, 128>}, {pipeline_mode = #tpu.pipeline_mode<synchronous>, transform_indices = @transform_2, window_bounds = array<i64: 4, 1>}, {transform_indices = @transform_3, window_bounds = array<i64: 4, 128>}]} {
    %c0 = arith.constant 0 : index
    %c0_0 = arith.constant 0 : index
    %0 = vector.load %arg1[%c0, %c0_0] : memref<4x128xbf16, #tpu.memory_space<vmem>>, vector<4x128xbf16>
    %c0_1 = arith.constant 0 : index
    %c0_2 = arith.constant 0 : index
    %1 = vector.load %arg2[%c0_1, %c0_2] : memref<128x128xbf16, #tpu.memory_space<vmem>>, vector<128x128xbf16>
    %cst = arith.constant dense<0.000000e+00> : vector<4x128xf32>
    %2 = tpu.matmul %0, %1, %cst {dimension_numbers = #tpu.dot_dimension_numbers<[1], [0], [0], [1], [0, 0, 1, 1], [], []>} : vector<4x128xbf16>, vector<128x128xbf16>, vector<4x128xf32> -> vector<4x128xf32>
    %c0_3 = arith.constant 0 : index
    %c0_4 = arith.constant 0 : index
    %3 = vector.load %arg3[%c0_3, %c0_4] : memref<4x1xf32, #tpu.memory_space<vmem>>, vector<4x1xf32>
    %4 = vector.broadcast %3 : vector<4x1xf32> to vector<4x128xf32>
    %5 = arith.addf %2, %4 : vector<4x128xf32>
    %6 = math.tanh %5 : vector<4x128xf32>
    %c0_5 = arith.constant 0 : index
    %c0_6 = arith.constant 0 : index
    %7 = vector.load %arg4[%c0_5, %c0_6] : memref<4x128xf32, #tpu.memory_space<vmem>>, vector<4x128xf32>
    tpu.vector_store %arg4[%c0_5, %c0_6], %6 {strides = array<i32>} : memref<4x128xf32, #tpu.memory_space<vmem>>, vector<4x128xf32>,
    return
  }
  func.func @transform_0(%arg0: i32) -> (i32, i32) {
    %c0_i32 = arith.constant 0 : i32
    %c0_i32_0 = arith.constant 0 : i32
    %c0_i32_1 = arith.constant 0 : i32
    return %c0_i32, %c0_i32_0 : i32, i32
  }
  func.func @transform_1(%arg0: i32) -> (i32, i32) {
    %c0_i32 = arith.constant 0 : i32
    %c0_i32_0 = arith.constant 0 : i32
    return %c0_i32, %arg0 : i32, i32
  }
  func.func @transform_2(%arg0: i32) -> (i32, i32) {
    %c0_i32 = arith.constant 0 : i32
    %c0_i32_0 = arith.constant 0 : i32
    %c0_i32_1 = arith.constant 0 : i32
    return %c0_i32, %c0_i32_0 : i32, i32
  }
  func.func @transform_3(%arg0: i32) -> (i32, i32) {
    %c0_i32 = arith.constant 0 : i32
    %c0_i32_0 = arith.constant 0 : i32
    return %c0_i32, %arg0 : i32, i32
  }
}

</mosaic_0001>

<llo_original>
// kernel: conv_autoencoder_forward.6
$region0: #{conv_autoencoder_forward.6}
  #allocation0 [shape = 'u32[]', space=smem, size = 0x4, offset = 0x4, fixed_abs, tag = 'smem constant byte address 0x4 - core index']
  #allocation1 [shape = 'u32[144,128]{1,0:T(1,128)}', space=vmem, size = 0x12000, scoped, tag = 'internal scratch']
  %s0 = inlined_call_operand.vmem [shape: bf16[32,9], index: 0, kind: input, shape index: {}]
  %s1 = inlined_call_operand.vmem [shape: bf16[9,128], index: 1, kind: input, shape index: {}]
  %s2 = inlined_call_operand.vmem [shape: bf16[32,128], index: 2, kind: output, shape index: {0}]
  %s3 = inlined_call_operand.vmem [shape: f32[1,32,2], index: 3, kind: output, shape index: {1}]
  %4 = xla_tuple %s2, %s3
  %s5 = sld [smem:[#allocation0]]
  $region26: #{conv_autoencoder_forward.6} parent=0
    _
  %s7 = ssub.s32 1, %s5
  %s8 = scalar_select 0, %s7, %s5
  // Predicated region
  $region2: #{conv_autoencoder_forward.6} parent=0 // pred_check
    _
  $region3: #{conv_autoencoder_forward.6} parent=0 // pred_check_branch
    %10 = sbr.rel (0) target = $region5
  $region4: #{conv_autoencoder_forward.6} parent=0 // pred_region
    _
  $region5: #{conv_autoencoder_forward.6} parent=0 // pred_fallthru
    _
  // Predicated region
  $region6: #{conv_autoencoder_forward.6} parent=0 // pred_check
    _
  $region7: #{conv_autoencoder_forward.6} parent=0 // pred_check_branch
    %12 = sbr.rel (0) target = $region9
  $region8: #{conv_autoencoder_forward.6} parent=0 // pred_region
    _
  $region9: #{conv_autoencoder_forward.6} parent=0 // pred_fallthru
    _
  %v14 = vld [vmem:[%s0] sm:$0xf]
  %v15 = vld [vmem:[%s0 + $0x4] sm:$0xf]
  %v16 = vld [vmem:[%s0 + $0x8] sm:$0xf]
  %v17 = vld [vmem:[%s0 + $0xc] sm:$0xf]
  %v18 = vld [vmem:[%s1] sm:$0xf]
  %v19 = vld [vmem:[%s1 + $0x4] sm:$0x1]
  %v24 = vunpack.c.l.b16 %v14
  %v25 = vunpack.c.l.b16 %v15
  %v26 = vunpack.c.l.b16 %v16
  %v27 = vunpack.c.l.b16 %v17
  %v28 = vpack.c.b16 %v25, %v24
  %v29 = vpack.c.b16 %v27, %v26
  %v32 = vunpack.c.l.b16 %v18
  %v33 = vunpack.c.l.b16 %v19
  %v34 = vpack.c.b16 %v33, %v32
  %vm35 = vcmask 72704
  %v37 = vsel %vm35, %v28, 0
  %v40 = vsel %vm35, %v29, 0
  %vm42 = vcmask 1043456
  %vm43 = vcmask 1044480
  %v44 = vsel %vm42, 4294967295, 65535
  %v45 = vsel %vm43, %v44, 0
  %v47 = vand.u32 %v34, %v45
  %49 = vmatprep.subr.bf16.mxu0 0
  %50 = vmatpush1.bf16.msra.mxu0 %v47
  %51 = vmatprep.subr.bf16.mxu0 0
  %52 = vmatpush1.bf16.msra.mxu0 0
  %53 = vmatprep.subr.bf16.mxu0 0
  %54 = vmatpush1.bf16.msra.mxu0 0
  %55 = vmatprep.subr.bf16.mxu0 0
  %56 = vmatpush1.bf16.msra.mxu0 0
  %57 = vmatprep.subr.bf16.mxu0 0
  %58 = vmatpush1.bf16.msra.mxu0 0
  %59 = vmatprep.subr.bf16.mxu0 0
  %60 = vmatpush1.bf16.msra.mxu0 0
  %61 = vmatprep.subr.bf16.mxu0 0
  %62 = vmatpush1.bf16.msra.mxu0 0
  %63 = vmatprep.subr.bf16.mxu0 0
  %64 = vmatpush1.bf16.msra.mxu0 0
  %65 = vmatprep.subr.bf16.mxu0 0
  %66 = vmatpush1.bf16.msra.mxu0 0
  %67 = vmatprep.subr.bf16.mxu0 0
  %68 = vmatpush1.bf16.msra.mxu0 0
  %69 = vmatprep.subr.bf16.mxu0 0
  %70 = vmatpush1.bf16.msra.mxu0 0
  %71 = vmatprep.subr.bf16.mxu0 0
  %72 = vmatpush1.bf16.msra.mxu0 0
  %73 = vmatprep.subr.bf16.mxu0 0
  %74 = vmatpush1.bf16.msra.mxu0 0
  %75 = vmatprep.subr.bf16.mxu0 0
  %76 = vmatpush1.bf16.msra.mxu0 0
  %77 = vmatprep.subr.bf16.mxu0 0
  %78 = vmatpush1.bf16.msra.mxu0 0
  %79 = vmatprep.subr.bf16.mxu0 0
  %80 = vmatpush1.bf16.msra.mxu0 0
  %81 = vmatprep.mubr.bf16.mxu0 0
  %82 = vmatmul.mubr.bf16.gmra.mrb[0].mxu0 %v37
  %v83 = vpop.f32.mrb[0].mxu0
  %v84 = vadd.f32 0.0, %v83
  %v85 = vpop.f32.mrb[0].mxu0
  %v86 = vpop.f32.mrb[0].mxu0
  %v87 = vadd.f32 0.0, %v86
  %v88 = vpop.f32.mrb[0].mxu0
  %89 = vmatprep.mubr.bf16.mxu0 0
  %90 = vmatmul.mubr.bf16.gmra.mrb[0].mxu0 %v40
  %v91 = vpop.f32.mrb[0].mxu0
  %v92 = vadd.f32 0.0, %v91
  %v93 = vpop.f32.mrb[0].mxu0
  %v94 = vpop.f32.mrb[0].mxu0
  %v95 = vadd.f32 0.0, %v94
  %v96 = vpop.f32.mrb[0].mxu0
  %97 = vdwg.mxu0
  %v98 = vpack.c.bf16 %v87, %v84
  %v99 = vpack.c.bf16 %v95, %v92
  %v102 = vunpack.c.l.b16 %v98
  %v103 = vunpack.c.h.b16 %v98
  %v104 = vunpack.c.l.b16 %v99
  %v105 = vunpack.c.h.b16 %v99
  %v106 = vpack.c.b16 %v102, %v102
  %v107 = vpack.c.b16 %v103, %v103
  %v108 = vpack.c.b16 %v104, %v104
  %v109 = vpack.c.b16 %v105, %v105
  %114 = vst [vmem:[%s2] sm:$0xf] %v106
  %115 = vst [vmem:[%s2 + $0x4] sm:$0xf] %v107
  %116 = vst [vmem:[%s2 + $0x8] sm:$0xf] %v108
  %117 = vst [vmem:[%s2 + $0xc] sm:$0xf] %v109
  %118 = vadd.xlane.f32.xlu0 %v84
  %v119 = vpop.xlane.xlu0 %118
  %120 = vadd.xlane.f32.xlu0 %v87
  %v121 = vpop.xlane.xlu0 %120
  %122 = vadd.xlane.f32.xlu0 %v92
  %v123 = vpop.xlane.xlu0 %122
  %124 = vadd.xlane.f32.xlu0 %v95
  %v125 = vpop.xlane.xlu0 %124
  %vm126 = vcmask 7168
  %127 = vst.msk [vmem:[%s3] sm:$0xff] %vm126, %v119
  %128 = vst.msk [vmem:[%s3 + $0x8] sm:$0xff] %vm126, %v121
  %129 = vst.msk [vmem:[%s3 + $0x10] sm:$0xff] %vm126, %v123
  %130 = vst.msk [vmem:[%s3 + $0x18] sm:$0xff] %vm126, %v125
  %v131 = vmul.f32 %v84, %v84
  %v132 = vmul.f32 %v87, %v87
  %v133 = vmul.f32 %v92, %v92
  %v134 = vmul.f32 %v95, %v95
  %135 = vadd.xlane.f32.xlu0 %v131
  %v136 = vpop.xlane.xlu0 %135
  %137 = vadd.xlane.f32.xlu0 %v132
  %v138 = vpop.xlane.xlu0 %137
  %139 = vadd.xlane.f32.xlu0 %v133
  %v140 = vpop.xlane.xlu0 %139
  %141 = vadd.xlane.f32.xlu0 %v134
  %v142 = vpop.xlane.xlu0 %141
  %vm143 = vcmask 15368
  %144 = vst.msk [vmem:[%s3] sm:$0xff] %vm143, %v136
  %145 = vst.msk [vmem:[%s3 + $0x8] sm:$0xff] %vm143, %v138
  %146 = vst.msk [vmem:[%s3 + $0x10] sm:$0xff] %vm143, %v140
  %147 = vst.msk [vmem:[%s3 + $0x18] sm:$0xff] %vm143, %v142
  // Predicated region
  $region10: #{conv_autoencoder_forward.6} parent=0 // pred_check
    _
  $region11: #{conv_autoencoder_forward.6} parent=0 // pred_check_branch
    %149 = sbr.rel (0) target = $region13
  $region12: #{conv_autoencoder_forward.6} parent=0 // pred_region
    _
  $region13: #{conv_autoencoder_forward.6} parent=0 // pred_fallthru
    _
  // Predicated region
  $region14: #{conv_autoencoder_forward.6} parent=0 // pred_check
    _
  $region15: #{conv_autoencoder_forward.6} parent=0 // pred_check_branch
    %151 = sbr.rel (0) target = $region17
  $region16: #{conv_autoencoder_forward.6} parent=0 // pred_region
    _
  $region17: #{conv_autoencoder_forward.6} parent=0 // pred_fallthru
    _
  // Predicated region
  $region18: #{conv_autoencoder_forward.6} parent=0 // pred_check
    _
  $region19: #{conv_autoencoder_forward.6} parent=0 // pred_check_branch
    %153 = sbr.rel (0) target = $region21
  $region20: #{conv_autoencoder_forward.6} parent=0 // pred_region
    _
  $region21: #{conv_autoencoder_forward.6} parent=0 // pred_fallthru
    _
  // Predicated region
  $region22: #{conv_autoencoder_forward.6} parent=0 // pred_check
    _
  $region23: #{conv_autoencoder_forward.6} parent=0 // pred_check_branch
    %155 = sbr.rel (0) target = $region25
  $region24: #{conv_autoencoder_forward.6} parent=0 // pred_region
    _
  $region25: #{conv_autoencoder_forward.6} parent=0 // pred_fallthru
    _

// kernel: conv_autoencoder_forward.7
$region0: #{conv_autoencoder_forward.7}
  #allocation0 [shape = 'u32[]', space=smem, size = 0x4, offset = 0x4, fixed_abs, tag = 'smem constant byte address 0x4 - core index']
  #allocation1 [shape = 'u32[144,128]{1,0:T(1,128)}', space=vmem, size = 0x12000, scoped, tag = 'internal scratch']
  %s0 = inlined_call_operand.vmem [shape: bf16[16,288], index: 0, kind: input, shape index: {}]
  %s1 = inlined_call_operand.vmem [shape: bf16[288,128], index: 1, kind: input, shape index: {}]
  %s2 = inlined_call_operand.vmem [shape: bf16[16,128], index: 2, kind: output, shape index: {0}]
  %s3 = inlined_call_operand.vmem [shape: f32[1,16,2], index: 3, kind: output, shape index: {1}]
  %4 = xla_tuple %s2, %s3
  %s5 = sld [smem:[#allocation0]]
  $region26: #{conv_autoencoder_forward.7} parent=0
    _
  %s7 = ssub.s32 1, %s5
  %s8 = scalar_select 0, %s7, %s5
  // Predicated region
  $region2: #{conv_autoencoder_forward.7} parent=0 // pred_check
    _
  $region3: #{conv_autoencoder_forward.7} parent=0 // pred_check_branch
    %10 = sbr.rel (0) target = $region5
  $region4: #{conv_autoencoder_forward.7} parent=0 // pred_region
    _
  $region5: #{conv_autoencoder_forward.7} parent=0 // pred_fallthru
    _
  // Predicated region
  $region6: #{conv_autoencoder_forward.7} parent=0 // pred_check
    _
  $region7: #{conv_autoencoder_forward.7} parent=0 // pred_check_branch
    %12 = sbr.rel (0) target = $region9
  $region8: #{conv_autoencoder_forward.7} parent=0 // pred_region
    _
  $region9: #{conv_autoencoder_forward.7} parent=0 // pred_fallthru
    _
  %v14 = vld [vmem:[%s0] sm:$0xff]
  %v15 = vld [vmem:[%s0 + $0x8] sm:$0xf]
  %v16 = vld [vmem:[%s0 + $0xc] sm:$0xff]
  %v17 = vld [vmem:[%s0 + $0x14] sm:$0xf]
  %v18 = vld [vmem:[%s1] sm:$0xf]
  %v19 = vld [vmem:[%s1 + $0x4] sm:$0xf]
  %v20 = vld [vmem:[%s1 + $0x8] sm:$0xf]
  %v21 = vld [vmem:[%s1 + $0xc] sm:$0xf]
  %v22 = vld [vmem:[%s1 + $0x10] sm:$0xf]
  %v23 = vld [vmem:[%s1 + $0x14] sm:$0xf]
  %v24 = vld [vmem:[%s1 + $0x18] sm:$0xf]
  %v25 = vld [vmem:[%s1 + $0x1c] sm:$0xf]
  %v26 = vld [vmem:[%s1 + $0x20] sm:$0xf]
  %v27 = vld [vmem:[%s1 + $0x24] sm:$0xf]
  %v28 = vld [vmem:[%s1 + $0x28] sm:$0xf]
  %v29 = vld [vmem:[%s1 + $0x2c] sm:$0xf]
  %v30 = vld [vmem:[%s1 + $0x30] sm:$0xf]
  %v31 = vld [vmem:[%s1 + $0x34] sm:$0xf]
  %v32 = vld [vmem:[%s1 + $0x38] sm:$0xf]
  %v33 = vld [vmem:[%s1 + $0x3c] sm:$0xf]
  %v34 = vld [vmem:[%s1 + $0x40] sm:$0xf]
  %v35 = vld [vmem:[%s1 + $0x44] sm:$0xf]
  %v36 = vld [vmem:[%s1 + $0x48] sm:$0xf]
  %v37 = vld [vmem:[%s1 + $0x4c] sm:$0xf]
  %v38 = vld [vmem:[%s1 + $0x50] sm:$0xf]
  %v39 = vld [vmem:[%s1 + $0x54] sm:$0xf]
  %v40 = vld [vmem:[%s1 + $0x58] sm:$0xf]
  %v41 = vld [vmem:[%s1 + $0x5c] sm:$0xf]
  %v42 = vld [vmem:[%s1 + $0x60] sm:$0xf]
  %v43 = vld [vmem:[%s1 + $0x64] sm:$0xf]
  %v44 = vld [vmem:[%s1 + $0x68] sm:$0xf]
  %v45 = vld [vmem:[%s1 + $0x6c] sm:$0xf]
  %v46 = vld [vmem:[%s1 + $0x70] sm:$0xf]
  %v47 = vld [vmem:[%s1 + $0x74] sm:$0xf]
  %v48 = vld [vmem:[%s1 + $0x78] sm:$0xf]
  %v49 = vld [vmem:[%s1 + $0x7c] sm:$0xf]
  %v50 = vld [vmem:[%s1 + $0x80] sm:$0xf]
  %v51 = vld [vmem:[%s1 + $0x84] sm:$0xf]
  %v52 = vld [vmem:[%s1 + $0x88] sm:$0xf]
  %v53 = vld [vmem:[%s1 + $0x8c] sm:$0xf]
  %v58 = vunpack.c.l.b16 %v14
  %v59 = vunpack.c.h.b16 %v14
  %v60 = vunpack.c.l.b16 %v15
  %v61 = vunpack.c.l.b16 %v16
  %v62 = vunpack.c.h.b16 %v16
  %v63 = vunpack.c.l.b16 %v17
  %v64 = vpack.c.b16 %v61, %v58
  %v65 = vpack.c.b16 %v62, %v59
  %v66 = vpack.c.b16 %v63, %v60
  %v105 = vunpack.c.l.b16 %v18
  %v106 = vunpack.c.l.b16 %v19
  %v107 = vunpack.c.l.b16 %v20
  %v108 = vunpack.c.l.b16 %v21
  %v109 = vunpack.c.l.b16 %v22
  %v110 = vunpack.c.l.b16 %v23
  %v111 = vunpack.c.l.b16 %v24
  %v112 = vunpack.c.l.b16 %v25
  %v113 = vunpack.c.l.b16 %v26
  %v114 = vunpack.c.l.b16 %v27
  %v115 = vunpack.c.l.b16 %v28
  %v116 = vunpack.c.l.b16 %v29
  %v117 = vunpack.c.l.b16 %v30
  %v118 = vunpack.c.l.b16 %v31
  %v119 = vunpack.c.l.b16 %v32
  %v120 = vunpack.c.l.b16 %v33
  %v121 = vunpack.c.l.b16 %v34
  %v122 = vunpack.c.l.b16 %v35
  %v123 = vunpack.c.l.b16 %v36
  %v124 = vunpack.c.l.b16 %v37
  %v125 = vunpack.c.l.b16 %v38
  %v126 = vunpack.c.l.b16 %v39
  %v127 = vunpack.c.l.b16 %v40
  %v128 = vunpack.c.l.b16 %v41
  %v129 = vunpack.c.l.b16 %v42
  %v130 = vunpack.c.l.b16 %v43
  %v131 = vunpack.c.l.b16 %v44
  %v132 = vunpack.c.l.b16 %v45
  %v133 = vunpack.c.l.b16 %v46
  %v134 = vunpack.c.l.b16 %v47
  %v135 = vunpack.c.l.b16 %v48
  %v136 = vunpack.c.l.b16 %v49
  %v137 = vunpack.c.l.b16 %v50
  %v138 = vunpack.c.l.b16 %v51
  %v139 = vunpack.c.l.b16 %v52
  %v140 = vunpack.c.l.b16 %v53
  %v141 = vpack.c.b16 %v106, %v105
  %v142 = vpack.c.b16 %v108, %v107
  %v143 = vpack.c.b16 %v110, %v109
  %v144 = vpack.c.b16 %v112, %v111
  %v145 = vpack.c.b16 %v114, %v113
  %v146 = vpack.c.b16 %v116, %v115
  %v147 = vpack.c.b16 %v118, %v117
  %v148 = vpack.c.b16 %v120, %v119
  %v149 = vpack.c.b16 %v122, %v121
  %v150 = vpack.c.b16 %v124, %v123
  %v151 = vpack.c.b16 %v126, %v125
  %v152 = vpack.c.b16 %v128, %v127
  %v153 = vpack.c.b16 %v130, %v129
  %v154 = vpack.c.b16 %v132, %v131
  %v155 = vpack.c.b16 %v134, %v133
  %v156 = vpack.c.b16 %v136, %v135
  %v157 = vpack.c.b16 %v138, %v137
  %v158 = vpack.c.b16 %v140, %v139
  %vm177 = vcmask 261120
  %v179 = vsel %vm177, %v66, 0
  %181 = vmatprep.subr.bf16.mxu0 0
  %182 = vmatpush1.bf16.msra.mxu0 %v141
  %183 = vmatprep.subr.bf16.mxu0 0
  %184 = vmatpush1.bf16.msra.mxu0 %v142
  %185 = vmatprep.subr.bf16.mxu0 0
  %186 = vmatpush1.bf16.msra.mxu0 %v143
  %187 = vmatprep.subr.bf16.mxu0 0
  %188 = vmatpush1.bf16.msra.mxu0 %v144
  %189 = vmatprep.subr.bf16.mxu0 0
  %190 = vmatpush1.bf16.msra.mxu0 %v145
  %191 = vmatprep.subr.bf16.mxu0 0
  %192 = vmatpush1.bf16.msra.mxu0 %v146
  %193 = vmatprep.subr.bf16.mxu0 0
  %194 = vmatpush1.bf16.msra.mxu0 %v147
  %195 = vmatprep.subr.bf16.mxu0 0
  %196 = vmatpush1.bf16.msra.mxu0 %v148
  %197 = vmatprep.subr.bf16.mxu0 0
  %198 = vmatpush1.bf16.msra.mxu0 %v149
  %199 = vmatprep.subr.bf16.mxu0 0
  %200 = vmatpush1.bf16.msra.mxu0 %v150
  %201 = vmatprep.subr.bf16.mxu0 0
  %202 = vmatpush1.bf16.msra.mxu0 %v151
  %203 = vmatprep.subr.bf16.mxu0 0
  %204 = vmatpush1.bf16.msra.mxu0 %v152
  %205 = vmatprep.subr.bf16.mxu0 0
  %206 = vmatpush1.bf16.msra.mxu0 %v153
  %207 = vmatprep.subr.bf16.mxu0 0
  %208 = vmatpush1.bf16.msra.mxu0 %v154
  %209 = vmatprep.subr.bf16.mxu0 0
  %210 = vmatpush1.bf16.msra.mxu0 %v155
  %211 = vmatprep.subr.bf16.mxu0 0
  %212 = vmatpush1.bf16.msra.mxu0 %v156
  %213 = vmatprep.mubr.bf16.mxu0 %v65
  %214 = vmatmul.mubr.bf16.gmra.mrb[0].mxu0 %v64
  %v215 = vpop.f32.mrb[0].mxu0
  %v216 = vadd.f32 0.0, %v215
  %v217 = vpop.f32.mrb[0].mxu0
  %v218 = vpop.f32.mrb[0].mxu0
  %v219 = vadd.f32 0.0, %v218
  %v220 = vpop.f32.mrb[0].mxu0
  %221 = vdwg.mxu0
  %222 = vmatprep.subr.bf16.mxu0 0
  %223 = vmatpush1.bf16.msra.mxu0 %v157
  %224 = vmatprep.subr.bf16.mxu0 0
  %225 = vmatpush1.bf16.msra.mxu0 %v158
  %226 = vmatprep.subr.bf16.mxu0 0
  %227 = vmatpush1.bf16.msra.mxu0 0
  %228 = vmatprep.subr.bf16.mxu0 0
  %229 = vmatpush1.bf16.msra.mxu0 0
  %230 = vmatprep.subr.bf16.mxu0 0
  %231 = vmatpush1.bf16.msra.mxu0 0
  %232 = vmatprep.subr.bf16.mxu0 0
  %233 = vmatpush1.bf16.msra.mxu0 0
  %234 = vmatprep.subr.bf16.mxu0 0
  %235 = vmatpush1.bf16.msra.mxu0 0
  %236 = vmatprep.subr.bf16.mxu0 0
  %237 = vmatpush1.bf16.msra.mxu0 0
  %238 = vmatprep.subr.bf16.mxu0 0
  %239 = vmatpush1.bf16.msra.mxu0 0
  %240 = vmatprep.subr.bf16.mxu0 0
  %241 = vmatpush1.bf16.msra.mxu0 0
  %242 = vmatprep.subr.bf16.mxu0 0
  %243 = vmatpush1.bf16.msra.mxu0 0
  %244 = vmatprep.subr.bf16.mxu0 0
  %245 = vmatpush1.bf16.msra.mxu0 0
  %246 = vmatprep.subr.bf16.mxu0 0
  %247 = vmatpush1.bf16.msra.mxu0 0
  %248 = vmatprep.subr.bf16.mxu0 0
  %249 = vmatpush1.bf16.msra.mxu0 0
  %250 = vmatprep.subr.bf16.mxu0 0
  %251 = vmatpush1.bf16.msra.mxu0 0
  %252 = vmatprep.subr.bf16.mxu0 0
  %253 = vmatpush1.bf16.msra.mxu0 0
  %254 = vmatprep.mubr.bf16.mxu0 0
  %255 = vmatmul.mubr.bf16.gmra.mrb[0].mxu0 %v179
  %v256 = vpop.f32.mrb[0].mxu0
  %v257 = vadd.f32 %v216, %v256
  %v258 = vpop.f32.mrb[0].mxu0
  %v259 = vpop.f32.mrb[0].mxu0
  %v260 = vadd.f32 %v219, %v259
  %v261 = vpop.f32.mrb[0].mxu0
  %262 = vdwg.mxu0
  %v263 = vpack.c.bf16 %v260, %v257
  %v265 = vunpack.c.l.b16 %v263
  %v266 = vunpack.c.h.b16 %v263
  %v267 = vpack.c.b16 %v265, %v265
  %v268 = vpack.c.b16 %v266, %v266
  %271 = vst [vmem:[%s2] sm:$0xf] %v267
  %272 = vst [vmem:[%s2 + $0x4] sm:$0xf] %v268
  %273 = vadd.xlane.f32.xlu0 %v257
  %v274 = vpop.xlane.xlu0 %273
  %275 = vadd.xlane.f32.xlu0 %v260
  %v276 = vpop.xlane.xlu0 %275
  %vm277 = vcmask 7168
  %278 = vst.msk [vmem:[%s3] sm:$0xff] %vm277, %v274
  %279 = vst.msk [vmem:[%s3 + $0x8] sm:$0xff] %vm277, %v276
  %v280 = vmul.f32 %v257, %v257
  %v281 = vmul.f32 %v260, %v260
  %282 = vadd.xlane.f32.xlu0 %v280
  %v283 = vpop.xlane.xlu0 %282
  %284 = vadd.xlane.f32.xlu0 %v281
  %v285 = vpop.xlane.xlu0 %284
  %vm286 = vcmask 15368
  %287 = vst.msk [vmem:[%s3] sm:$0xff] %vm286, %v283
  %288 = vst.msk [vmem:[%s3 + $0x8] sm:$0xff] %vm286, %v285
  // Predicated region
  $region10: #{conv_autoencoder_forward.7} parent=0 // pred_check
    _
  $region11: #{conv_autoencoder_forward.7} parent=0 // pred_check_branch
    %290 = sbr.rel (0) target = $region13
  $region12: #{conv_autoencoder_forward.7} parent=0 // pred_region
    _
  $region13: #{conv_autoencoder_forward.7} parent=0 // pred_fallthru
    _
  // Predicated region
  $region14: #{conv_autoencoder_forward.7} parent=0 // pred_check
    _
  $region15: #{conv_autoencoder_forward.7} parent=0 // pred_check_branch
    %292 = sbr.rel (0) target = $region17
  $region16: #{conv_autoencoder_forward.7} parent=0 // pred_region
    _
  $region17: #{conv_autoencoder_forward.7} parent=0 // pred_fallthru
    _
  // Predicated region
  $region18: #{conv_autoencoder_forward.7} parent=0 // pred_check
    _
  $region19: #{conv_autoencoder_forward.7} parent=0 // pred_check_branch
    %294 = sbr.rel (0) target = $region21
  $region20: #{conv_autoencoder_forward.7} parent=0 // pred_region
    _
  $region21: #{conv_autoencoder_forward.7} parent=0 // pred_fallthru
    _
  // Predicated region
  $region22: #{conv_autoencoder_forward.7} parent=0 // pred_check
    _
  $region23: #{conv_autoencoder_forward.7} parent=0 // pred_check_branch
    %296 = sbr.rel (0) target = $region25
  $region24: #{conv_autoencoder_forward.7} parent=0 // pred_region
    _
  $region25: #{conv_autoencoder_forward.7} parent=0 // pred_fallthru
    _

// kernel: conv_autoencoder_forward.8
$region0: #{conv_autoencoder_forward.8}
  #allocation0 [shape = 'u32[]', space=smem, size = 0x4, offset = 0x4, fixed_abs, tag = 'smem constant byte address 0x4 - core index']
  #allocation1 [shape = 'u32[144,128]{1,0:T(1,128)}', space=vmem, size = 0x12000, scoped, tag = 'internal scratch']
  %s0 = inlined_call_operand.vmem [shape: bf16[8,144], index: 0, kind: input, shape index: {}]
  %s1 = inlined_call_operand.vmem [shape: bf16[144,128], index: 1, kind: input, shape index: {}]
  %s2 = inlined_call_operand.vmem [shape: bf16[8,128], index: 2, kind: output, shape index: {0}]
  %s3 = inlined_call_operand.vmem [shape: f32[1,8,2], index: 3, kind: output, shape index: {1}]
  %4 = xla_tuple %s2, %s3
  %s5 = sld [smem:[#allocation0]]
  $region26: #{conv_autoencoder_forward.8} parent=0
    _
  %s7 = ssub.s32 1, %s5
  %s8 = scalar_select 0, %s7, %s5
  // Predicated region
  $region2: #{conv_autoencoder_forward.8} parent=0 // pred_check
    _
  $region3: #{conv_autoencoder_forward.8} parent=0 // pred_check_branch
    %10 = sbr.rel (0) target = $region5
  $region4: #{conv_autoencoder_forward.8} parent=0 // pred_region
    _
  $region5: #{conv_autoencoder_forward.8} parent=0 // pred_fallthru
    _
  // Predicated region
  $region6: #{conv_autoencoder_forward.8} parent=0 // pred_check
    _
  $region7: #{conv_autoencoder_forward.8} parent=0 // pred_check_branch
    %12 = sbr.rel (0) target = $region9
  $region8: #{conv_autoencoder_forward.8} parent=0 // pred_region
    _
  $region9: #{conv_autoencoder_forward.8} parent=0 // pred_fallthru
    _
  %v14 = vld [vmem:[%s0] sm:$0xff]
  %v15 = vld [vmem:[%s1] sm:$0xf]
  %v16 = vld [vmem:[%s1 + $0x4] sm:$0xf]
  %v17 = vld [vmem:[%s1 + $0x8] sm:$0xf]
  %v18 = vld [vmem:[%s1 + $0xc] sm:$0xf]
  %v19 = vld [vmem:[%s1 + $0x10] sm:$0xf]
  %v20 = vld [vmem:[%s1 + $0x14] sm:$0xf]
  %v21 = vld [vmem:[%s1 + $0x18] sm:$0xf]
  %v22 = vld [vmem:[%s1 + $0x1c] sm:$0xf]
  %v23 = vld [vmem:[%s1 + $0x20] sm:$0xf]
  %v24 = vld [vmem:[%s1 + $0x24] sm:$0xf]
  %v25 = vld [vmem:[%s1 + $0x28] sm:$0xf]
  %v26 = vld [vmem:[%s1 + $0x2c] sm:$0xf]
  %v27 = vld [vmem:[%s1 + $0x30] sm:$0xf]
  %v28 = vld [vmem:[%s1 + $0x34] sm:$0xf]
  %v29 = vld [vmem:[%s1 + $0x38] sm:$0xf]
  %v30 = vld [vmem:[%s1 + $0x3c] sm:$0xf]
  %v31 = vld [vmem:[%s1 + $0x40] sm:$0xf]
  %v32 = vld [vmem:[%s1 + $0x44] sm:$0xf]
  %v34 = vunpack.c.l.b16 %v14
  %v35 = vunpack.c.h.b16 %v14
  %v36 = vpack.c.b16 %v34, %v34
  %v37 = vpack.c.b16 %v35, %v35
  %v57 = vunpack.c.l.b16 %v15
  %v58 = vunpack.c.l.b16 %v16
  %v59 = vunpack.c.l.b16 %v17
  %v60 = vunpack.c.l.b16 %v18
  %v61 = vunpack.c.l.b16 %v19
  %v62 = vunpack.c.l.b16 %v20
  %v63 = vunpack.c.l.b16 %v21
  %v64 = vunpack.c.l.b16 %v22
  %v65 = vunpack.c.l.b16 %v23
  %v66 = vunpack.c.l.b16 %v24
  %v67 = vunpack.c.l.b16 %v25
  %v68 = vunpack.c.l.b16 %v26
  %v69 = vunpack.c.l.b16 %v27
  %v70 = vunpack.c.l.b16 %v28
  %v71 = vunpack.c.l.b16 %v29
  %v72 = vunpack.c.l.b16 %v30
  %v73 = vunpack.c.l.b16 %v31
  %v74 = vunpack.c.l.b16 %v32
  %v75 = vpack.c.b16 %v58, %v57
  %v76 = vpack.c.b16 %v60, %v59
  %v77 = vpack.c.b16 %v62, %v61
  %v78 = vpack.c.b16 %v64, %v63
  %v79 = vpack.c.b16 %v66, %v65
  %v80 = vpack.c.b16 %v68, %v67
  %v81 = vpack.c.b16 %v70, %v69
  %v82 = vpack.c.b16 %v72, %v71
  %v83 = vpack.c.b16 %v74, %v73
  %vm93 = vcmask 130048
  %v95 = vsel %vm93, %v37, 0
  %97 = vmatprep.subr.bf16.mxu0 0
  %98 = vmatpush1.bf16.msra.mxu0 %v75
  %99 = vmatprep.subr.bf16.mxu0 0
  %100 = vmatpush1.bf16.msra.mxu0 %v76
  %101 = vmatprep.subr.bf16.mxu0 0
  %102 = vmatpush1.bf16.msra.mxu0 %v77
  %103 = vmatprep.subr.bf16.mxu0 0
  %104 = vmatpush1.bf16.msra.mxu0 %v78
  %105 = vmatprep.subr.bf16.mxu0 0
  %106 = vmatpush1.bf16.msra.mxu0 %v79
  %107 = vmatprep.subr.bf16.mxu0 0
  %108 = vmatpush1.bf16.msra.mxu0 %v80
  %109 = vmatprep.subr.bf16.mxu0 0
  %110 = vmatpush1.bf16.msra.mxu0 %v81
  %111 = vmatprep.subr.bf16.mxu0 0
  %112 = vmatpush1.bf16.msra.mxu0 %v82
  %113 = vmatprep.subr.bf16.mxu0 0
  %114 = vmatpush1.bf16.msra.mxu0 %v83
  %115 = vmatprep.subr.bf16.mxu0 0
  %116 = vmatpush1.bf16.msra.mxu0 0
  %117 = vmatprep.subr.bf16.mxu0 0
  %118 = vmatpush1.bf16.msra.mxu0 0
  %119 = vmatprep.subr.bf16.mxu0 0
  %120 = vmatpush1.bf16.msra.mxu0 0
  %121 = vmatprep.subr.bf16.mxu0 0
  %122 = vmatpush1.bf16.msra.mxu0 0
  %123 = vmatprep.subr.bf16.mxu0 0
  %124 = vmatpush1.bf16.msra.mxu0 0
  %125 = vmatprep.subr.bf16.mxu0 0
  %126 = vmatpush1.bf16.msra.mxu0 0
  %127 = vmatprep.subr.bf16.mxu0 0
  %128 = vmatpush1.bf16.msra.mxu0 0
  %129 = vmatprep.mubr.bf16.mxu0 %v95
  %130 = vmatmul.mubr.bf16.gmra.mrb[0].mxu0 %v36
  %v131 = vpop.f32.mrb[0].mxu0
  %v132 = vadd.f32 0.0, %v131
  %v133 = vpop.f32.mrb[0].mxu0
  %v134 = vpop.f32.mrb[0].mxu0
  %v135 = vpop.f32.mrb[0].mxu0
  %136 = vdwg.mxu0
  %v137 = vpack.c.bf16 %v132, %v132
  %138 = vst [vmem:[%s2] sm:$0xf] %v137
  %139 = vadd.xlane.f32.xlu0 %v132
  %v140 = vpop.xlane.xlu0 %139
  %vm141 = vcmask 7168
  %142 = vst.msk [vmem:[%s3] sm:$0xff] %vm141, %v140
  %v143 = vmul.f32 %v132, %v132
  %144 = vadd.xlane.f32.xlu0 %v143
  %v145 = vpop.xlane.xlu0 %144
  %vm146 = vcmask 15368
  %147 = vst.msk [vmem:[%s3] sm:$0xff] %vm146, %v145
  // Predicated region
  $region10: #{conv_autoencoder_forward.8} parent=0 // pred_check
    _
  $region11: #{conv_autoencoder_forward.8} parent=0 // pred_check_branch
    %149 = sbr.rel (0) target = $region13
  $region12: #{conv_autoencoder_forward.8} parent=0 // pred_region
    _
  $region13: #{conv_autoencoder_forward.8} parent=0 // pred_fallthru
    _
  // Predicated region
  $region14: #{conv_autoencoder_forward.8} parent=0 // pred_check
    _
  $region15: #{conv_autoencoder_forward.8} parent=0 // pred_check_branch
    %151 = sbr.rel (0) target = $region17
  $region16: #{conv_autoencoder_forward.8} parent=0 // pred_region
    _
  $region17: #{conv_autoencoder_forward.8} parent=0 // pred_fallthru
    _
  // Predicated region
  $region18: #{conv_autoencoder_forward.8} parent=0 // pred_check
    _
  $region19: #{conv_autoencoder_forward.8} parent=0 // pred_check_branch
    %153 = sbr.rel (0) target = $region21
  $region20: #{conv_autoencoder_forward.8} parent=0 // pred_region
    _
  $region21: #{conv_autoencoder_forward.8} parent=0 // pred_fallthru
    _
  // Predicated region
  $region22: #{conv_autoencoder_forward.8} parent=0 // pred_check
    _
  $region23: #{conv_autoencoder_forward.8} parent=0 // pred_check_branch
    %155 = sbr.rel (0) target = $region25
  $region24: #{conv_autoencoder_forward.8} parent=0 // pred_region
    _
  $region25: #{conv_autoencoder_forward.8} parent=0 // pred_fallthru
    _

// kernel: conv_autoencoder_forward.9
$region0: #{conv_autoencoder_forward.9}
  #allocation0 [shape = 'u32[]', space=smem, size = 0x4, offset = 0x4, fixed_abs, tag = 'smem constant byte address 0x4 - core index']
  #allocation1 [shape = 'u32[144,128]{1,0:T(1,128)}', space=vmem, size = 0x12000, scoped, tag = 'internal scratch']
  %s0 = inlined_call_operand.vmem [shape: bf16[64,32], index: 0, kind: input, shape index: {}]
  %s1 = inlined_call_operand.vmem [shape: bf16[32,128], index: 1, kind: input, shape index: {}]
  %s2 = inlined_call_operand.vmem [shape: bf16[64,128], index: 2, kind: output, shape index: {0}]
  %s3 = inlined_call_operand.vmem [shape: f32[1,64,2], index: 3, kind: output, shape index: {1}]
  %4 = xla_tuple %s2, %s3
  %s5 = sld [smem:[#allocation0]]
  $region26: #{conv_autoencoder_forward.9} parent=0
    _
  %s7 = ssub.s32 1, %s5
  %s8 = scalar_select 0, %s7, %s5
  // Predicated region
  $region2: #{conv_autoencoder_forward.9} parent=0 // pred_check
    _
  $region3: #{conv_autoencoder_forward.9} parent=0 // pred_check_branch
    %10 = sbr.rel (0) target = $region5
  $region4: #{conv_autoencoder_forward.9} parent=0 // pred_region
    _
  $region5: #{conv_autoencoder_forward.9} parent=0 // pred_fallthru
    _
  // Predicated region
  $region6: #{conv_autoencoder_forward.9} parent=0 // pred_check
    _
  $region7: #{conv_autoencoder_forward.9} parent=0 // pred_check_branch
    %12 = sbr.rel (0) target = $region9
  $region8: #{conv_autoencoder_forward.9} parent=0 // pred_region
    _
  $region9: #{conv_autoencoder_forward.9} parent=0 // pred_fallthru
    _
  %v14 = vld [vmem:[%s0] sm:$0xf]
  %v15 = vld [vmem:[%s0 + $0x4] sm:$0xf]
  %v16 = vld [vmem:[%s0 + $0x8] sm:$0xf]
  %v17 = vld [vmem:[%s0 + $0xc] sm:$0xf]
  %v18 = vld [vmem:[%s0 + $0x10] sm:$0xf]
  %v19 = vld [vmem:[%s0 + $0x14] sm:$0xf]
  %v20 = vld [vmem:[%s0 + $0x18] sm:$0xf]
  %v21 = vld [vmem:[%s0 + $0x1c] sm:$0xf]
  %v22 = vld [vmem:[%s1] sm:$0xf]
  %v23 = vld [vmem:[%s1 + $0x4] sm:$0xf]
  %v24 = vld [vmem:[%s1 + $0x8] sm:$0xf]
  %v25 = vld [vmem:[%s1 + $0xc] sm:$0xf]
  %v34 = vunpack.c.l.b16 %v14
  %v35 = vunpack.c.l.b16 %v15
  %v36 = vunpack.c.l.b16 %v16
  %v37 = vunpack.c.l.b16 %v17
  %v38 = vunpack.c.l.b16 %v18
  %v39 = vunpack.c.l.b16 %v19
  %v40 = vunpack.c.l.b16 %v20
  %v41 = vunpack.c.l.b16 %v21
  %v42 = vpack.c.b16 %v35, %v34
  %v43 = vpack.c.b16 %v37, %v36
  %v44 = vpack.c.b16 %v39, %v38
  %v45 = vpack.c.b16 %v41, %v40
  %v50 = vunpack.c.l.b16 %v22
  %v51 = vunpack.c.l.b16 %v23
  %v52 = vunpack.c.l.b16 %v24
  %v53 = vunpack.c.l.b16 %v25
  %v54 = vpack.c.b16 %v51, %v50
  %v55 = vpack.c.b16 %v53, %v52
  %vm58 = vcmask 261120
  %v60 = vsel %vm58, %v42, 0
  %v63 = vsel %vm58, %v43, 0
  %v66 = vsel %vm58, %v44, 0
  %v69 = vsel %vm58, %v45, 0
  %71 = vmatprep.subr.bf16.mxu0 0
  %72 = vmatpush1.bf16.msra.mxu0 %v54
  %73 = vmatprep.subr.bf16.mxu0 0
  %74 = vmatpush1.bf16.msra.mxu0 %v55
  %75 = vmatprep.subr.bf16.mxu0 0
  %76 = vmatpush1.bf16.msra.mxu0 0
  %77 = vmatprep.subr.bf16.mxu0 0
  %78 = vmatpush1.bf16.msra.mxu0 0
  %79 = vmatprep.subr.bf16.mxu0 0
  %80 = vmatpush1.bf16.msra.mxu0 0
  %81 = vmatprep.subr.bf16.mxu0 0
  %82 = vmatpush1.bf16.msra.mxu0 0
  %83 = vmatprep.subr.bf16.mxu0 0
  %84 = vmatpush1.bf16.msra.mxu0 0
  %85 = vmatprep.subr.bf16.mxu0 0
  %86 = vmatpush1.bf16.msra.mxu0 0
  %87 = vmatprep.subr.bf16.mxu0 0
  %88 = vmatpush1.bf16.msra.mxu0 0
  %89 = vmatprep.subr.bf16.mxu0 0
  %90 = vmatpush1.bf16.msra.mxu0 0
  %91 = vmatprep.subr.bf16.mxu0 0
  %92 = vmatpush1.bf16.msra.mxu0 0
  %93 = vmatprep.subr.bf16.mxu0 0
  %94 = vmatpush1.bf16.msra.mxu0 0
  %95 = vmatprep.subr.bf16.mxu0 0
  %96 = vmatpush1.bf16.msra.mxu0 0
  %97 = vmatprep.subr.bf16.mxu0 0
  %98 = vmatpush1.bf16.msra.mxu0 0
  %99 = vmatprep.subr.bf16.mxu0 0
  %100 = vmatpush1.bf16.msra.mxu0 0
  %101 = vmatprep.subr.bf16.mxu0 0
  %102 = vmatpush1.bf16.msra.mxu0 0
  %103 = vmatprep.mubr.bf16.mxu0 0
  %104 = vmatmul.mubr.bf16.gmra.mrb[0].mxu0 %v60
  %v105 = vpop.f32.mrb[0].mxu0
  %v106 = vadd.f32 0.0, %v105
  %v107 = vpop.f32.mrb[0].mxu0
  %v108 = vpop.f32.mrb[0].mxu0
  %v109 = vadd.f32 0.0, %v108
  %v110 = vpop.f32.mrb[0].mxu0
  %111 = vmatprep.mubr.bf16.mxu0 0
  %112 = vmatmul.mubr.bf16.gmra.mrb[0].mxu0 %v63
  %v113 = vpop.f32.mrb[0].mxu0
  %v114 = vadd.f32 0.0, %v113
  %v115 = vpop.f32.mrb[0].mxu0
  %v116 = vpop.f32.mrb[0].mxu0
  %v117 = vadd.f32 0.0, %v116
  %v118 = vpop.f32.mrb[0].mxu0
  %119 = vmatprep.mubr.bf16.mxu0 0
  %120 = vmatmul.mubr.bf16.gmra.mrb[0].mxu0 %v66
  %v121 = vpop.f32.mrb[0].mxu0
  %v122 = vadd.f32 0.0, %v121
  %v123 = vpop.f32.mrb[0].mxu0
  %v124 = vpop.f32.mrb[0].mxu0
  %v125 = vadd.f32 0.0, %v124
  %v126 = vpop.f32.mrb[0].mxu0
  %127 = vmatprep.mubr.bf16.mxu0 0
  %128 = vmatmul.mubr.bf16.gmra.mrb[0].mxu0 %v69
  %v129 = vpop.f32.mrb[0].mxu0
  %v130 = vadd.f32 0.0, %v129
  %v131 = vpop.f32.mrb[0].mxu0
  %v132 = vpop.f32.mrb[0].mxu0
  %v133 = vadd.f32 0.0, %v132
  %v134 = vpop.f32.mrb[0].mxu0
  %135 = vdwg.mxu0
  %v136 = vpack.c.bf16 %v109, %v106
  %v137 = vpack.c.bf16 %v117, %v114
  %v138 = vpack.c.bf16 %v125, %v122
  %v139 = vpack.c.bf16 %v133, %v130
  %v144 = vunpack.c.l.b16 %v136
  %v145 = vunpack.c.h.b16 %v136
  %v146 = vunpack.c.l.b16 %v137
  %v147 = vunpack.c.h.b16 %v137
  %v148 = vunpack.c.l.b16 %v138
  %v149 = vunpack.c.h.b16 %v138
  %v150 = vunpack.c.l.b16 %v139
  %v151 = vunpack.c.h.b16 %v139
  %v152 = vpack.c.b16 %v144, %v144
  %v153 = vpack.c.b16 %v145, %v145
  %v154 = vpack.c.b16 %v146, %v146
  %v155 = vpack.c.b16 %v147, %v147
  %v156 = vpack.c.b16 %v148, %v148
  %v157 = vpack.c.b16 %v149, %v149
  %v158 = vpack.c.b16 %v150, %v150
  %v159 = vpack.c.b16 %v151, %v151
  %168 = vst [vmem:[%s2] sm:$0xf] %v152
  %169 = vst [vmem:[%s2 + $0x4] sm:$0xf] %v153
  %170 = vst [vmem:[%s2 + $0x8] sm:$0xf] %v154
  %171 = vst [vmem:[%s2 + $0xc] sm:$0xf] %v155
  %172 = vst [vmem:[%s2 + $0x10] sm:$0xf] %v156
  %173 = vst [vmem:[%s2 + $0x14] sm:$0xf] %v157
  %174 = vst [vmem:[%s2 + $0x18] sm:$0xf] %v158
  %175 = vst [vmem:[%s2 + $0x1c] sm:$0xf] %v159
  %176 = vadd.xlane.f32.xlu0 %v106
  %v177 = vpop.xlane.xlu0 %176
  %178 = vadd.xlane.f32.xlu0 %v109
  %v179 = vpop.xlane.xlu0 %178
  %180 = vadd.xlane.f32.xlu0 %v114
  %v181 = vpop.xlane.xlu0 %180
  %182 = vadd.xlane.f32.xlu0 %v117
  %v183 = vpop.xlane.xlu0 %182
  %184 = vadd.xlane.f32.xlu0 %v122
  %v185 = vpop.xlane.xlu0 %184
  %186 = vadd.xlane.f32.xlu0 %v125
  %v187 = vpop.xlane.xlu0 %186
  %188 = vadd.xlane.f32.xlu0 %v130
  %v189 = vpop.xlane.xlu0 %188
  %190 = vadd.xlane.f32.xlu0 %v133
  %v191 = vpop.xlane.xlu0 %190
  %vm192 = vcmask 7168
  %193 = vst.msk [vmem:[%s3] sm:$0xff] %vm192, %v177
  %194 = vst.msk [vmem:[%s3 + $0x8] sm:$0xff] %vm192, %v179
  %195 = vst.msk [vmem:[%s3 + $0x10] sm:$0xff] %vm192, %v181
  %196 = vst.msk [vmem:[%s3 + $0x18] sm:$0xff] %vm192, %v183
  %197 = vst.msk [vmem:[%s3 + $0x20] sm:$0xff] %vm192, %v185
  %198 = vst.msk [vmem:[%s3 + $0x28] sm:$0xff] %vm192, %v187
  %199 = vst.msk [vmem:[%s3 + $0x30] sm:$0xff] %vm192, %v189
  %200 = vst.msk [vmem:[%s3 + $0x38] sm:$0xff] %vm192, %v191
  %v201 = vmul.f32 %v106, %v106
  %v202 = vmul.f32 %v109, %v109
  %v203 = vmul.f32 %v114, %v114
  %v204 = vmul.f32 %v117, %v117
  %v205 = vmul.f32 %v122, %v122
  %v206 = vmul.f32 %v125, %v125
  %v207 = vmul.f32 %v130, %v130
  %v208 = vmul.f32 %v133, %v133
  %209 = vadd.xlane.f32.xlu0 %v201
  %v210 = vpop.xlane.xlu0 %209
  %211 = vadd.xlane.f32.xlu0 %v202
  %v212 = vpop.xlane.xlu0 %211
  %213 = vadd.xlane.f32.xlu0 %v203
  %v214 = vpop.xlane.xlu0 %213
  %215 = vadd.xlane.f32.xlu0 %v204
  %v216 = vpop.xlane.xlu0 %215
  %217 = vadd.xlane.f32.xlu0 %v205
  %v218 = vpop.xlane.xlu0 %217
  %219 = vadd.xlane.f32.xlu0 %v206
  %v220 = vpop.xlane.xlu0 %219
  %221 = vadd.xlane.f32.xlu0 %v207
  %v222 = vpop.xlane.xlu0 %221
  %223 = vadd.xlane.f32.xlu0 %v208
  %v224 = vpop.xlane.xlu0 %223
  %vm225 = vcmask 15368
  %226 = vst.msk [vmem:[%s3] sm:$0xff] %vm225, %v210
  %227 = vst.msk [vmem:[%s3 + $0x8] sm:$0xff] %vm225, %v212
  %228 = vst.msk [vmem:[%s3 + $0x10] sm:$0xff] %vm225, %v214
  %229 = vst.msk [vmem:[%s3 + $0x18] sm:$0xff] %vm225, %v216
  %230 = vst.msk [vmem:[%s3 + $0x20] sm:$0xff] %vm225, %v218
  %231 = vst.msk [vmem:[%s3 + $0x28] sm:$0xff] %vm225, %v220
  %232 = vst.msk [vmem:[%s3 + $0x30] sm:$0xff] %vm225, %v222
  %233 = vst.msk [vmem:[%s3 + $0x38] sm:$0xff] %vm225, %v224
  // Predicated region
  $region10: #{conv_autoencoder_forward.9} parent=0 // pred_check
    _
  $region11: #{conv_autoencoder_forward.9} parent=0 // pred_check_branch
    %235 = sbr.rel (0) target = $region13
  $region12: #{conv_autoencoder_forward.9} parent=0 // pred_region
    _
  $region13: #{conv_autoencoder_forward.9} parent=0 // pred_fallthru
    _
  // Predicated region
  $region14: #{conv_autoencoder_forward.9} parent=0 // pred_check
    _
  $region15: #{conv_autoencoder_forward.9} parent=0 // pred_check_branch
    %237 = sbr.rel (0) target = $region17
  $region16: #{conv_autoencoder_forward.9} parent=0 // pred_region
    _
  $region17: #{conv_autoencoder_forward.9} parent=0 // pred_fallthru
    _
  // Predicated region
  $region18: #{conv_autoencoder_forward.9} parent=0 // pred_check
    _
  $region19: #{conv_autoencoder_forward.9} parent=0 // pred_check_branch
    %239 = sbr.rel (0) target = $region21
  $region20: #{conv_autoencoder_forward.9} parent=0 // pred_region
    _
  $region21: #{conv_autoencoder_forward.9} parent=0 // pred_fallthru
    _
  // Predicated region
  $region22: #{conv_autoencoder_forward.9} parent=0 // pred_check
    _
  $region23: #{conv_autoencoder_forward.9} parent=0 // pred_check_branch
    %241 = sbr.rel (0) target = $region25
  $region24: #{conv_autoencoder_forward.9} parent=0 // pred_region
    _
  $region25: #{conv_autoencoder_forward.9} parent=0 // pred_fallthru
    _

// kernel: conv_autoencoder_forward.10
$region0: #{conv_autoencoder_forward.10}
  #allocation0 [shape = 'u32[]', space=smem, size = 0x4, offset = 0x4, fixed_abs, tag = 'smem constant byte address 0x4 - core index']
  #allocation1 [shape = 'u32[144,128]{1,0:T(1,128)}', space=vmem, size = 0x12000, scoped, tag = 'internal scratch']
  %s0 = inlined_call_operand.vmem [shape: bf16[128,64], index: 0, kind: input, shape index: {}]
  %s1 = inlined_call_operand.vmem [shape: bf16[64,128], index: 1, kind: input, shape index: {}]
  %s2 = inlined_call_operand.vmem [shape: bf16[128,128], index: 2, kind: output, shape index: {0}]
  %s3 = inlined_call_operand.vmem [shape: f32[1,128,2], index: 3, kind: output, shape index: {1}]
  %4 = xla_tuple %s2, %s3
  %s5 = sld [smem:[#allocation0]]
  $region26: #{conv_autoencoder_forward.10} parent=0
    _
  %s7 = ssub.s32 1, %s5
  %s8 = scalar_select 0, %s7, %s5
  // Predicated region
  $region2: #{conv_autoencoder_forward.10} parent=0 // pred_check
    _
  $region3: #{conv_autoencoder_forward.10} parent=0 // pred_check_branch
    %10 = sbr.rel (0) target = $region5
  $region4: #{conv_autoencoder_forward.10} parent=0 // pred_region
    _
  $region5: #{conv_autoencoder_forward.10} parent=0 // pred_fallthru
    _
  // Predicated region
  $region6: #{conv_autoencoder_forward.10} parent=0 // pred_check
    _
  $region7: #{conv_autoencoder_forward.10} parent=0 // pred_check_branch
    %12 = sbr.rel (0) target = $region9
  $region8: #{conv_autoencoder_forward.10} parent=0 // pred_region
    _
  $region9: #{conv_autoencoder_forward.10} parent=0 // pred_fallthru
    _
  %v14 = vld [vmem:[%s0] sm:$0xf]
  %v15 = vld [vmem:[%s0 + $0x4] sm:$0xf]
  %v16 = vld [vmem:[%s0 + $0x8] sm:$0xf]
  %v17 = vld [vmem:[%s0 + $0xc] sm:$0xf]
  %v18 = vld [vmem:[%s0 + $0x10] sm:$0xf]
  %v19 = vld [vmem:[%s0 + $0x14] sm:$0xf]
  %v20 = vld [vmem:[%s0 + $0x18] sm:$0xf]
  %v21 = vld [vmem:[%s0 + $0x1c] sm:$0xf]
  %v22 = vld [vmem:[%s0 + $0x20] sm:$0xf]
  %v23 = vld [vmem:[%s0 + $0x24] sm:$0xf]
  %v24 = vld [vmem:[%s0 + $0x28] sm:$0xf]
  %v25 = vld [vmem:[%s0 + $0x2c] sm:$0xf]
  %v26 = vld [vmem:[%s0 + $0x30] sm:$0xf]
  %v27 = vld [vmem:[%s0 + $0x34] sm:$0xf]
  %v28 = vld [vmem:[%s0 + $0x38] sm:$0xf]
  %v29 = vld [vmem:[%s0 + $0x3c] sm:$0xf]
  %v30 = vld [vmem:[%s1] sm:$0xf]
  %v31 = vld [vmem:[%s1 + $0x4] sm:$0xf]
  %v32 = vld [vmem:[%s1 + $0x8] sm:$0xf]
  %v33 = vld [vmem:[%s1 + $0xc] sm:$0xf]
  %v34 = vld [vmem:[%s1 + $0x10] sm:$0xf]
  %v35 = vld [vmem:[%s1 + $0x14] sm:$0xf]
  %v36 = vld [vmem:[%s1 + $0x18] sm:$0xf]
  %v37 = vld [vmem:[%s1 + $0x1c] sm:$0xf]
  %v54 = vunpack.c.l.b16 %v14
  %v55 = vunpack.c.l.b16 %v15
  %v56 = vunpack.c.l.b16 %v16
  %v57 = vunpack.c.l.b16 %v17
  %v58 = vunpack.c.l.b16 %v18
  %v59 = vunpack.c.l.b16 %v19
  %v60 = vunpack.c.l.b16 %v20
  %v61 = vunpack.c.l.b16 %v21
  %v62 = vunpack.c.l.b16 %v22
  %v63 = vunpack.c.l.b16 %v23
  %v64 = vunpack.c.l.b16 %v24
  %v65 = vunpack.c.l.b16 %v25
  %v66 = vunpack.c.l.b16 %v26
  %v67 = vunpack.c.l.b16 %v27
  %v68 = vunpack.c.l.b16 %v28
  %v69 = vunpack.c.l.b16 %v29
  %v70 = vpack.c.b16 %v55, %v54
  %v71 = vpack.c.b16 %v57, %v56
  %v72 = vpack.c.b16 %v59, %v58
  %v73 = vpack.c.b16 %v61, %v60
  %v74 = vpack.c.b16 %v63, %v62
  %v75 = vpack.c.b16 %v65, %v64
  %v76 = vpack.c.b16 %v67, %v66
  %v77 = vpack.c.b16 %v69, %v68
  %v86 = vunpack.c.l.b16 %v30
  %v87 = vunpack.c.l.b16 %v31
  %v88 = vunpack.c.l.b16 %v32
  %v89 = vunpack.c.l.b16 %v33
  %v90 = vunpack.c.l.b16 %v34
  %v91 = vunpack.c.l.b16 %v35
  %v92 = vunpack.c.l.b16 %v36
  %v93 = vunpack.c.l.b16 %v37
  %v94 = vpack.c.b16 %v87, %v86
  %v95 = vpack.c.b16 %v89, %v88
  %v96 = vpack.c.b16 %v91, %v90
  %v97 = vpack.c.b16 %v93, %v92
  %vm102 = vcmask 523264
  %v104 = vsel %vm102, %v70, 0
  %v107 = vsel %vm102, %v71, 0
  %v110 = vsel %vm102, %v72, 0
  %v113 = vsel %vm102, %v73, 0
  %v116 = vsel %vm102, %v74, 0
  %v119 = vsel %vm102, %v75, 0
  %v122 = vsel %vm102, %v76, 0
  %v125 = vsel %vm102, %v77, 0
  %127 = vmatprep.subr.bf16.mxu0 0
  %128 = vmatpush1.bf16.msra.mxu0 %v94
  %129 = vmatprep.subr.bf16.mxu0 0
  %130 = vmatpush1.bf16.msra.mxu0 %v95
  %131 = vmatprep.subr.bf16.mxu0 0
  %132 = vmatpush1.bf16.msra.mxu0 %v96
  %133 = vmatprep.subr.bf16.mxu0 0
  %134 = vmatpush1.bf16.msra.mxu0 %v97
  %135 = vmatprep.subr.bf16.mxu0 0
  %136 = vmatpush1.bf16.msra.mxu0 0
  %137 = vmatprep.subr.bf16.mxu0 0
  %138 = vmatpush1.bf16.msra.mxu0 0
  %139 = vmatprep.subr.bf16.mxu0 0
  %140 = vmatpush1.bf16.msra.mxu0 0
  %141 = vmatprep.subr.bf16.mxu0 0
  %142 = vmatpush1.bf16.msra.mxu0 0
  %143 = vmatprep.subr.bf16.mxu0 0
  %144 = vmatpush1.bf16.msra.mxu0 0
  %145 = vmatprep.subr.bf16.mxu0 0
  %146 = vmatpush1.bf16.msra.mxu0 0
  %147 = vmatprep.subr.bf16.mxu0 0
  %148 = vmatpush1.bf16.msra.mxu0 0
  %149 = vmatprep.subr.bf16.mxu0 0
  %150 = vmatpush1.bf16.msra.mxu0 0
  %151 = vmatprep.subr.bf16.mxu0 0
  %152 = vmatpush1.bf16.msra.mxu0 0
  %153 = vmatprep.subr.bf16.mxu0 0
  %154 = vmatpush1.bf16.msra.mxu0 0
  %155 = vmatprep.subr.bf16.mxu0 0
  %156 = vmatpush1.bf16.msra.mxu0 0
  %157 = vmatprep.subr.bf16.mxu0 0
  %158 = vmatpush1.bf16.msra.mxu0 0
  %159 = vmatprep.mubr.bf16.mxu0 0
  %160 = vmatmul.mubr.bf16.gmra.mrb[0].mxu0 %v104
  %v161 = vpop.f32.mrb[0].mxu0
  %v162 = vadd.f32 0.0, %v161
  %v163 = vpop.f32.mrb[0].mxu0
  %v164 = vpop.f32.mrb[0].mxu0
  %v165 = vadd.f32 0.0, %v164
  %v166 = vpop.f32.mrb[0].mxu0
  %167 = vmatprep.mubr.bf16.mxu0 0
  %168 = vmatmul.mubr.bf16.gmra.mrb[0].mxu0 %v107
  %v169 = vpop.f32.mrb[0].mxu0
  %v170 = vadd.f32 0.0, %v169
  %v171 = vpop.f32.mrb[0].mxu0
  %v172 = vpop.f32.mrb[0].mxu0
  %v173 = vadd.f32 0.0, %v172
  %v174 = vpop.f32.mrb[0].mxu0
  %175 = vmatprep.mubr.bf16.mxu0 0
  %176 = vmatmul.mubr.bf16.gmra.mrb[0].mxu0 %v110
  %v177 = vpop.f32.mrb[0].mxu0
  %v178 = vadd.f32 0.0, %v177
  %v179 = vpop.f32.mrb[0].mxu0
  %v180 = vpop.f32.mrb[0].mxu0
  %v181 = vadd.f32 0.0, %v180
  %v182 = vpop.f32.mrb[0].mxu0
  %183 = vmatprep.mubr.bf16.mxu0 0
  %184 = vmatmul.mubr.bf16.gmra.mrb[0].mxu0 %v113
  %v185 = vpop.f32.mrb[0].mxu0
  %v186 = vadd.f32 0.0, %v185
  %v187 = vpop.f32.mrb[0].mxu0
  %v188 = vpop.f32.mrb[0].mxu0
  %v189 = vadd.f32 0.0, %v188
  %v190 = vpop.f32.mrb[0].mxu0
  %191 = vmatprep.mubr.bf16.mxu0 0
  %192 = vmatmul.mubr.bf16.gmra.mrb[0].mxu0 %v116
  %v193 = vpop.f32.mrb[0].mxu0
  %v194 = vadd.f32 0.0, %v193
  %v195 = vpop.f32.mrb[0].mxu0
  %v196 = vpop.f32.mrb[0].mxu0
  %v197 = vadd.f32 0.0, %v196
  %v198 = vpop.f32.mrb[0].mxu0
  %199 = vmatprep.mubr.bf16.mxu0 0
  %200 = vmatmul.mubr.bf16.gmra.mrb[0].mxu0 %v119
  %v201 = vpop.f32.mrb[0].mxu0
  %v202 = vadd.f32 0.0, %v201
  %v203 = vpop.f32.mrb[0].mxu0
  %v204 = vpop.f32.mrb[0].mxu0
  %v205 = vadd.f32 0.0, %v204
  %v206 = vpop.f32.mrb[0].mxu0
  %207 = vmatprep.mubr.bf16.mxu0 0
  %208 = vmatmul.mubr.bf16.gmra.mrb[0].mxu0 %v122
  %v209 = vpop.f32.mrb[0].mxu0
  %v210 = vadd.f32 0.0, %v209
  %v211 = vpop.f32.mrb[0].mxu0
  %v212 = vpop.f32.mrb[0].mxu0
  %v213 = vadd.f32 0.0, %v212
  %v214 = vpop.f32.mrb[0].mxu0
  %215 = vmatprep.mubr.bf16.mxu0 0
  %216 = vmatmul.mubr.bf16.gmra.mrb[0].mxu0 %v125
  %v217 = vpop.f32.mrb[0].mxu0
  %v218 = vadd.f32 0.0, %v217
  %v219 = vpop.f32.mrb[0].mxu0
  %v220 = vpop.f32.mrb[0].mxu0
  %v221 = vadd.f32 0.0, %v220
  %v222 = vpop.f32.mrb[0].mxu0
  %223 = vdwg.mxu0
  %v224 = vpack.c.bf16 %v165, %v162
  %v225 = vpack.c.bf16 %v173, %v170
  %v226 = vpack.c.bf16 %v181, %v178
  %v227 = vpack.c.bf16 %v189, %v186
  %v228 = vpack.c.bf16 %v197, %v194
  %v229 = vpack.c.bf16 %v205, %v202
  %v230 = vpack.c.bf16 %v213, %v210
  %v231 = vpack.c.bf16 %v221, %v218
  %v240 = vunpack.c.l.b16 %v224
  %v241 = vunpack.c.h.b16 %v224
  %v242 = vunpack.c.l.b16 %v225
  %v243 = vunpack.c.h.b16 %v225
  %v244 = vunpack.c.l.b16 %v226
  %v245 = vunpack.c.h.b16 %v226
  %v246 = vunpack.c.l.b16 %v227
  %v247 = vunpack.c.h.b16 %v227
  %v248 = vunpack.c.l.b16 %v228
  %v249 = vunpack.c.h.b16 %v228
  %v250 = vunpack.c.l.b16 %v229
  %v251 = vunpack.c.h.b16 %v229
  %v252 = vunpack.c.l.b16 %v230
  %v253 = vunpack.c.h.b16 %v230
  %v254 = vunpack.c.l.b16 %v231
  %v255 = vunpack.c.h.b16 %v231
  %v256 = vpack.c.b16 %v240, %v240
  %v257 = vpack.c.b16 %v241, %v241
  %v258 = vpack.c.b16 %v242, %v242
  %v259 = vpack.c.b16 %v243, %v243
  %v260 = vpack.c.b16 %v244, %v244
  %v261 = vpack.c.b16 %v245, %v245
  %v262 = vpack.c.b16 %v246, %v246
  %v263 = vpack.c.b16 %v247, %v247
  %v264 = vpack.c.b16 %v248, %v248
  %v265 = vpack.c.b16 %v249, %v249
  %v266 = vpack.c.b16 %v250, %v250
  %v267 = vpack.c.b16 %v251, %v251
  %v268 = vpack.c.b16 %v252, %v252
  %v269 = vpack.c.b16 %v253, %v253
  %v270 = vpack.c.b16 %v254, %v254
  %v271 = vpack.c.b16 %v255, %v255
  %288 = vst [vmem:[%s2] sm:$0xf] %v256
  %289 = vst [vmem:[%s2 + $0x4] sm:$0xf] %v257
  %290 = vst [vmem:[%s2 + $0x8] sm:$0xf] %v258
  %291 = vst [vmem:[%s2 + $0xc] sm:$0xf] %v259
  %292 = vst [vmem:[%s2 + $0x10] sm:$0xf] %v260
  %293 = vst [vmem:[%s2 + $0x14] sm:$0xf] %v261
  %294 = vst [vmem:[%s2 + $0x18] sm:$0xf] %v262
  %295 = vst [vmem:[%s2 + $0x1c] sm:$0xf] %v263
  %296 = vst [vmem:[%s2 + $0x20] sm:$0xf] %v264
  %297 = vst [vmem:[%s2 + $0x24] sm:$0xf] %v265
  %298 = vst [vmem:[%s2 + $0x28] sm:$0xf] %v266
  %299 = vst [vmem:[%s2 + $0x2c] sm:$0xf] %v267
  %300 = vst [vmem:[%s2 + $0x30] sm:$0xf] %v268
  %301 = vst [vmem:[%s2 + $0x34] sm:$0xf] %v269
  %302 = vst [vmem:[%s2 + $0x38] sm:$0xf] %v270
  %303 = vst [vmem:[%s2 + $0x3c] sm:$0xf] %v271
  %304 = vadd.xlane.f32.xlu0 %v162
  %v305 = vpop.xlane.xlu0 %304
  %306 = vadd.xlane.f32.xlu0 %v165
  %v307 = vpop.xlane.xlu0 %306
  %308 = vadd.xlane.f32.xlu0 %v170
  %v309 = vpop.xlane.xlu0 %308
  %310 = vadd.xlane.f32.xlu0 %v173
  %v311 = vpop.xlane.xlu0 %310
  %312 = vadd.xlane.f32.xlu0 %v178
  %v313 = vpop.xlane.xlu0 %312
  %314 = vadd.xlane.f32.xlu0 %v181
  %v315 = vpop.xlane.xlu0 %314
  %316 = vadd.xlane.f32.xlu0 %v186
  %v317 = vpop.xlane.xlu0 %316
  %318 = vadd.xlane.f32.xlu0 %v189
  %v319 = vpop.xlane.xlu0 %318
  %320 = vadd.xlane.f32.xlu0 %v194
  %v321 = vpop.xlane.xlu0 %320
  %322 = vadd.xlane.f32.xlu0 %v197
  %v323 = vpop.xlane.xlu0 %322
  %324 = vadd.xlane.f32.xlu0 %v202
  %v325 = vpop.xlane.xlu0 %324
  %326 = vadd.xlane.f32.xlu0 %v205
  %v327 = vpop.xlane.xlu0 %326
  %328 = vadd.xlane.f32.xlu0 %v210
  %v329 = vpop.xlane.xlu0 %328
  %330 = vadd.xlane.f32.xlu0 %v213
  %v331 = vpop.xlane.xlu0 %330
  %332 = vadd.xlane.f32.xlu0 %v218
  %v333 = vpop.xlane.xlu0 %332
  %334 = vadd.xlane.f32.xlu0 %v221
  %v335 = vpop.xlane.xlu0 %334
  %vm336 = vcmask 7168
  %337 = vst.msk [vmem:[%s3] sm:$0xff] %vm336, %v305
  %338 = vst.msk [vmem:[%s3 + $0x8] sm:$0xff] %vm336, %v307
  %339 = vst.msk [vmem:[%s3 + $0x10] sm:$0xff] %vm336, %v309
  %340 = vst.msk [vmem:[%s3 + $0x18] sm:$0xff] %vm336, %v311
  %341 = vst.msk [vmem:[%s3 + $0x20] sm:$0xff] %vm336, %v313
  %342 = vst.msk [vmem:[%s3 + $0x28] sm:$0xff] %vm336, %v315
  %343 = vst.msk [vmem:[%s3 + $0x30] sm:$0xff] %vm336, %v317
  %344 = vst.msk [vmem:[%s3 + $0x38] sm:$0xff] %vm336, %v319
  %345 = vst.msk [vmem:[%s3 + $0x40] sm:$0xff] %vm336, %v321
  %346 = vst.msk [vmem:[%s3 + $0x48] sm:$0xff] %vm336, %v323
  %347 = vst.msk [vmem:[%s3 + $0x50] sm:$0xff] %vm336, %v325
  %348 = vst.msk [vmem:[%s3 + $0x58] sm:$0xff] %vm336, %v327
  %349 = vst.msk [vmem:[%s3 + $0x60] sm:$0xff] %vm336, %v329
  %350 = vst.msk [vmem:[%s3 + $0x68] sm:$0xff] %vm336, %v331
  %351 = vst.msk [vmem:[%s3 + $0x70] sm:$0xff] %vm336, %v333
  %352 = vst.msk [vmem:[%s3 + $0x78] sm:$0xff] %vm336, %v335
  %v353 = vmul.f32 %v162, %v162
  %v354 = vmul.f32 %v165, %v165
  %v355 = vmul.f32 %v170, %v170
  %v356 = vmul.f32 %v173, %v173
  %v357 = vmul.f32 %v178, %v178
  %v358 = vmul.f32 %v181, %v181
  %v359 = vmul.f32 %v186, %v186
  %v360 = vmul.f32 %v189, %v189
  %v361 = vmul.f32 %v194, %v194
  %v362 = vmul.f32 %v197, %v197
  %v363 = vmul.f32 %v202, %v202
  %v364 = vmul.f32 %v205, %v205
  %v365 = vmul.f32 %v210, %v210
  %v366 = vmul.f32 %v213, %v213
  %v367 = vmul.f32 %v218, %v218
  %v368 = vmul.f32 %v221, %v221
  %369 = vadd.xlane.f32.xlu0 %v353
  %v370 = vpop.xlane.xlu0 %369
  %371 = vadd.xlane.f32.xlu0 %v354
  %v372 = vpop.xlane.xlu0 %371
  %373 = vadd.xlane.f32.xlu0 %v355
  %v374 = vpop.xlane.xlu0 %373
  %375 = vadd.xlane.f32.xlu0 %v356
  %v376 = vpop.xlane.xlu0 %375
  %377 = vadd.xlane.f32.xlu0 %v357
  %v378 = vpop.xlane.xlu0 %377
  %379 = vadd.xlane.f32.xlu0 %v358
  %v380 = vpop.xlane.xlu0 %379
  %381 = vadd.xlane.f32.xlu0 %v359
  %v382 = vpop.xlane.xlu0 %381
  %383 = vadd.xlane.f32.xlu0 %v360
  %v384 = vpop.xlane.xlu0 %383
  %385 = vadd.xlane.f32.xlu0 %v361
  %v386 = vpop.xlane.xlu0 %385
  %387 = vadd.xlane.f32.xlu0 %v362
  %v388 = vpop.xlane.xlu0 %387
  %389 = vadd.xlane.f32.xlu0 %v363
  %v390 = vpop.xlane.xlu0 %389
  %391 = vadd.xlane.f32.xlu0 %v364
  %v392 = vpop.xlane.xlu0 %391
  %393 = vadd.xlane.f32.xlu0 %v365
  %v394 = vpop.xlane.xlu0 %393
  %395 = vadd.xlane.f32.xlu0 %v366
  %v396 = vpop.xlane.xlu0 %395
  %397 = vadd.xlane.f32.xlu0 %v367
  %v398 = vpop.xlane.xlu0 %397
  %399 = vadd.xlane.f32.xlu0 %v368
  %v400 = vpop.xlane.xlu0 %399
  %vm401 = vcmask 15368
  %402 = vst.msk [vmem:[%s3] sm:$0xff] %vm401, %v370
  %403 = vst.msk [vmem:[%s3 + $0x8] sm:$0xff] %vm401, %v372
  %404 = vst.msk [vmem:[%s3 + $0x10] sm:$0xff] %vm401, %v374
  %405 = vst.msk [vmem:[%s3 + $0x18] sm:$0xff] %vm401, %v376
  %406 = vst.msk [vmem:[%s3 + $0x20] sm:$0xff] %vm401, %v378
  %407 = vst.msk [vmem:[%s3 + $0x28] sm:$0xff] %vm401, %v380
  %408 = vst.msk [vmem:[%s3 + $0x30] sm:$0xff] %vm401, %v382
  %409 = vst.msk [vmem:[%s3 + $0x38] sm:$0xff] %vm401, %v384
  %410 = vst.msk [vmem:[%s3 + $0x40] sm:$0xff] %vm401, %v386
  %411 = vst.msk [vmem:[%s3 + $0x48] sm:$0xff] %vm401, %v388
  %412 = vst.msk [vmem:[%s3 + $0x50] sm:$0xff] %vm401, %v390
  %413 = vst.msk [vmem:[%s3 + $0x58] sm:$0xff] %vm401, %v392
  %414 = vst.msk [vmem:[%s3 + $0x60] sm:$0xff] %vm401, %v394
  %415 = vst.msk [vmem:[%s3 + $0x68] sm:$0xff] %vm401, %v396
  %416 = vst.msk [vmem:[%s3 + $0x70] sm:$0xff] %vm401, %v398
  %417 = vst.msk [vmem:[%s3 + $0x78] sm:$0xff] %vm401, %v400
  // Predicated region
  $region10: #{conv_autoencoder_forward.10} parent=0 // pred_check
    _
  $region11: #{conv_autoencoder_forward.10} parent=0 // pred_check_branch
    %419 = sbr.rel (0) target = $region13
  $region12: #{conv_autoencoder_forward.10} parent=0 // pred_region
    _
  $region13: #{conv_autoencoder_forward.10} parent=0 // pred_fallthru
    _
  // Predicated region
  $region14: #{conv_autoencoder_forward.10} parent=0 // pred_check
    _
  $region15: #{conv_autoencoder_forward.10} parent=0 // pred_check_branch
    %421 = sbr.rel (0) target = $region17
  $region16: #{conv_autoencoder_forward.10} parent=0 // pred_region
    _
  $region17: #{conv_autoencoder_forward.10} parent=0 // pred_fallthru
    _
  // Predicated region
  $region18: #{conv_autoencoder_forward.10} parent=0 // pred_check
    _
  $region19: #{conv_autoencoder_forward.10} parent=0 // pred_check_branch
    %423 = sbr.rel (0) target = $region21
  $region20: #{conv_autoencoder_forward.10} parent=0 // pred_region
    _
  $region21: #{conv_autoencoder_forward.10} parent=0 // pred_fallthru
    _
  // Predicated region
  $region22: #{conv_autoencoder_forward.10} parent=0 // pred_check
    _
  $region23: #{conv_autoencoder_forward.10} parent=0 // pred_check_branch
    %425 = sbr.rel (0) target = $region25
  $region24: #{conv_autoencoder_forward.10} parent=0 // pred_region
    _
  $region25: #{conv_autoencoder_forward.10} parent=0 // pred_fallthru
    _

// kernel: tile.7
$region0: #{tile.7}
  #allocation0 [shape = 's32[1]{0}', space=sflag, size = 0x4, scoped, tag = 'scoped memory for tile.7']
  %s0 = inlined_call_operand.<no memory space> [shape: f32[], index: 0, kind: input, shape index: {}]
  %s1 = inlined_call_operand.vmem [shape: f32[4,1], index: 1, kind: output, shape index: {}]
  %v2 = vstv %s0
  %3 = vst [vmem:[%s1] sm:$0xf] %v2

// kernel: conv_autoencoder_forward.11
$region0: #{conv_autoencoder_forward.11}
  #allocation0 [shape = 'u32[]', space=smem, size = 0x4, offset = 0x4, fixed_abs, tag = 'smem constant byte address 0x4 - core index']
  #allocation1 [shape = 'u32[144,128]{1,0:T(1,128)}', space=vmem, size = 0x12000, scoped, tag = 'internal scratch']
  %s0 = inlined_call_operand.vmem [shape: bf16[4,128], index: 0, kind: input, shape index: {}]
  %s1 = inlined_call_operand.vmem [shape: bf16[128,128], index: 1, kind: input, shape index: {}]
  %s2 = inlined_call_operand.vmem [shape: f32[4,1], index: 2, kind: input, shape index: {}]
  %s3 = inlined_call_operand.vmem [shape: f32[4,128], index: 3, kind: output, shape index: {}]
  %s4 = sld [smem:[#allocation0]]
  $region22: #{conv_autoencoder_forward.11} parent=0
    _
  %s6 = ssub.s32 1, %s4
  %s7 = scalar_select 0, %s6, %s4
  // Predicated region
  $region2: #{conv_autoencoder_forward.11} parent=0 // pred_check
    _
  $region3: #{conv_autoencoder_forward.11} parent=0 // pred_check_branch
    %9 = sbr.rel (0) target = $region5
  $region4: #{conv_autoencoder_forward.11} parent=0 // pred_region
    _
  $region5: #{conv_autoencoder_forward.11} parent=0 // pred_fallthru
    _
  // Predicated region
  $region6: #{conv_autoencoder_forward.11} parent=0 // pred_check
    _
  $region7: #{conv_autoencoder_forward.11} parent=0 // pred_check_branch
    %11 = sbr.rel (0) target = $region9
  $region8: #{conv_autoencoder_forward.11} parent=0 // pred_region
    _
  $region9: #{conv_autoencoder_forward.11} parent=0 // pred_fallthru
    _
  // Predicated region
  $region10: #{conv_autoencoder_forward.11} parent=0 // pred_check
    _
  $region11: #{conv_autoencoder_forward.11} parent=0 // pred_check_branch
    %13 = sbr.rel (0) target = $region13
  $region12: #{conv_autoencoder_forward.11} parent=0 // pred_region
    _
  $region13: #{conv_autoencoder_forward.11} parent=0 // pred_fallthru
    _
  %v15 = vld [vmem:[%s0] sm:$0x3]
  %v16 = vld [vmem:[%s1] sm:$0xf]
  %v17 = vld [vmem:[%s1 + $0x4] sm:$0xf]
  %v18 = vld [vmem:[%s1 + $0x8] sm:$0xf]
  %v19 = vld [vmem:[%s1 + $0xc] sm:$0xf]
  %v20 = vld [vmem:[%s1 + $0x10] sm:$0xf]
  %v21 = vld [vmem:[%s1 + $0x14] sm:$0xf]
  %v22 = vld [vmem:[%s1 + $0x18] sm:$0xf]
  %v23 = vld [vmem:[%s1 + $0x1c] sm:$0xf]
  %v24 = vld [vmem:[%s1 + $0x20] sm:$0xf]
  %v25 = vld [vmem:[%s1 + $0x24] sm:$0xf]
  %v26 = vld [vmem:[%s1 + $0x28] sm:$0xf]
  %v27 = vld [vmem:[%s1 + $0x2c] sm:$0xf]
  %v28 = vld [vmem:[%s1 + $0x30] sm:$0xf]
  %v29 = vld [vmem:[%s1 + $0x34] sm:$0xf]
  %v30 = vld [vmem:[%s1 + $0x38] sm:$0xf]
  %v31 = vld [vmem:[%s1 + $0x3c] sm:$0xf]
  %v32 = vld [vmem:[%s2] sm:$0xf]
  %34 = vset.pattern.permute.xlu0 0
  %35 = vperm.xlu0 %34, %v32
  %v36 = vpop.permute.xlu0 %35
  %v54 = vunpack.c.l.b16 %v16
  %v55 = vunpack.c.l.b16 %v17
  %v56 = vunpack.c.l.b16 %v18
  %v57 = vunpack.c.l.b16 %v19
  %v58 = vunpack.c.l.b16 %v20
  %v59 = vunpack.c.l.b16 %v21
  %v60 = vunpack.c.l.b16 %v22
  %v61 = vunpack.c.l.b16 %v23
  %v62 = vunpack.c.l.b16 %v24
  %v63 = vunpack.c.l.b16 %v25
  %v64 = vunpack.c.l.b16 %v26
  %v65 = vunpack.c.l.b16 %v27
  %v66 = vunpack.c.l.b16 %v28
  %v67 = vunpack.c.l.b16 %v29
  %v68 = vunpack.c.l.b16 %v30
  %v69 = vunpack.c.l.b16 %v31
  %v70 = vpack.c.b16 %v55, %v54
  %v71 = vpack.c.b16 %v57, %v56
  %v72 = vpack.c.b16 %v59, %v58
  %v73 = vpack.c.b16 %v61, %v60
  %v74 = vpack.c.b16 %v63, %v62
  %v75 = vpack.c.b16 %v65, %v64
  %v76 = vpack.c.b16 %v67, %v66
  %v77 = vpack.c.b16 %v69, %v68
  %86 = vmatprep.subr.bf16.mxu0 0
  %87 = vmatpush1.bf16.msra.mxu0 %v70
  %88 = vmatprep.subr.bf16.mxu0 0
  %89 = vmatpush1.bf16.msra.mxu0 %v71
  %90 = vmatprep.subr.bf16.mxu0 0
  %91 = vmatpush1.bf16.msra.mxu0 %v72
  %92 = vmatprep.subr.bf16.mxu0 0
  %93 = vmatpush1.bf16.msra.mxu0 %v73
  %94 = vmatprep.subr.bf16.mxu0 0
  %95 = vmatpush1.bf16.msra.mxu0 %v74
  %96 = vmatprep.subr.bf16.mxu0 0
  %97 = vmatpush1.bf16.msra.mxu0 %v75
  %98 = vmatprep.subr.bf16.mxu0 0
  %99 = vmatpush1.bf16.msra.mxu0 %v76
  %100 = vmatprep.subr.bf16.mxu0 0
  %101 = vmatpush1.bf16.msra.mxu0 %v77
  %102 = vmatprep.subr.bf16.mxu0 0
  %103 = vmatpush1.bf16.msra.mxu0 0
  %104 = vmatprep.subr.bf16.mxu0 0
  %105 = vmatpush1.bf16.msra.mxu0 0
  %106 = vmatprep.subr.bf16.mxu0 0
  %107 = vmatpush1.bf16.msra.mxu0 0
  %108 = vmatprep.subr.bf16.mxu0 0
  %109 = vmatpush1.bf16.msra.mxu0 0
  %110 = vmatprep.subr.bf16.mxu0 0
  %111 = vmatpush1.bf16.msra.mxu0 0
  %112 = vmatprep.subr.bf16.mxu0 0
  %113 = vmatpush1.bf16.msra.mxu0 0
  %114 = vmatprep.subr.bf16.mxu0 0
  %115 = vmatpush1.bf16.msra.mxu0 0
  %116 = vmatprep.subr.bf16.mxu0 0
  %117 = vmatpush1.bf16.msra.mxu0 0
  %118 = vmatprep.mubr.bf16.mxu0 0
  %119 = vmatmul.mubr.bf16.gmra.mrb[0].mxu0 %v15
  %v120 = vpop.f32.mrb[0].mxu0
  %v121 = vadd.f32 %v36, %v120
  %v122 = vpop.f32.mrb[0].mxu0
  %v123 = vpop.f32.mrb[0].mxu0
  %v124 = vpop.f32.mrb[0].mxu0
  %125 = vdwg.mxu0
  %v126 = vtanh.pop %v121
  %127 = vst [vmem:[%s3] sm:$0xf] %v126
  // Predicated region
  $region14: #{conv_autoencoder_forward.11} parent=0 // pred_check
    _
  $region15: #{conv_autoencoder_forward.11} parent=0 // pred_check_branch
    %129 = sbr.rel (0) target = $region17
  $region16: #{conv_autoencoder_forward.11} parent=0 // pred_region
    _
  $region17: #{conv_autoencoder_forward.11} parent=0 // pred_fallthru
    _
  // Predicated region
  $region18: #{conv_autoencoder_forward.11} parent=0 // pred_check
    _
  $region19: #{conv_autoencoder_forward.11} parent=0 // pred_check_branch
    %131 = sbr.rel (0) target = $region21
  $region20: #{conv_autoencoder_forward.11} parent=0 // pred_region
    _
  $region21: #{conv_autoencoder_forward.11} parent=0 // pred_fallthru
    _

</llo_original>
